<compile_context>
chip_gen: v7x
topology: tpu7x:2x2x1
jax: 0.10.0
libtpu: 0.0.40
codegen_flags: <defaults>
</compile_context>

<pallas_src>
import functools

import jax
import jax.numpy as jnp
import numpy as np
from jax.experimental import pallas as pl
from jax.experimental.pallas import tpu as pltpu


def _round_up(x, m):
    return (x + m - 1) // m * m


def _vmem_capacity_bytes():
    try:
        return int(pltpu.get_tpu_info().vmem_capacity_bytes)
    except Exception:
        return 64 << 20          # v7x per-TensorCore worst case


def _mxu_is_256_wide():
    try:
        kind = jax.devices()[0].device_kind.lower()
    except Exception:
        return False
    return any(t in kind for t in ("v6", "v7", "7x"))


# ----------------------------- Pallas kernel ------------------------------- #

def _conv_bn_act_kernel(x_ref, w_ref, b_ref, o_ref, lhs_ref, *,
                        kh, kw, stride, pad, oh, ow, cin, kp, tco,
                        residual, gate_build, co_axis):
    """One (image, cout-tile) grid step.

    x_ref:   (1, hps, wps, phc)  bf16, spatially padded, phase-packed
    w_ref:   (kp, tco)           bf16, BN scale folded in, K = kh*kw*cin pad 128
    b_ref:   (1, tco)            f32 fused bias (conv bias + BN shift)
    o_ref:   (1, oh*ow, tco)     bf16
    lhs_ref: (oh, ow, kp)        bf16 im2col scratch (built once per image)
    """
    m = oh * ow
    k_real = kh * kw * cin

    def build_lhs():
        # Gather all kh*kw taps once into the scratch; padded K tail is zeroed
        # so (garbage * zero-weight) can never produce NaNs.
        for i in range(kh):
            qi, ri = divmod(i, stride)
            for j in range(kw):
                qj, rj = divmod(j, stride)
                ph = ri * stride + rj                      # phase in packed C
                t = i * kw + j
                lhs_ref[:, :, t * cin:(t + 1) * cin] = (
                    x_ref[0, qi:qi + oh, qj:qj + ow,
                          ph * cin:(ph + 1) * cin])
        if kp > k_real:
            lhs_ref[:, :, k_real:] = jnp.zeros((oh, ow, kp - k_real),
                                               lhs_ref.dtype)

    if gate_build:
        # input-stationary ordering: the im2col LHS is valid for every cout
        # tile of the same image; rebuild only when the cout tile wraps to 0.
        pl.when(pl.program_id(co_axis) == 0)(build_lhs)
    else:
        build_lhs()

    # single fused matmul: MXU accumulates over the whole contraction.
    lhs = lhs_ref[...].reshape(m, kp)
    out = jnp.dot(lhs, w_ref[...], preferred_element_type=jnp.float32)
    out = out + b_ref[...]                                   # fused bias

    if residual:
        # Residual comes straight from the resident input tile (stride==1,
        # cin==cout => same padded channel layout); no extra HBM stream.
        # NOTE: residual is added in bf16 precision (input was cast).
        c0 = pl.multiple_of(pl.program_id(co_axis) * tco, 128)
        res = x_ref[0, pad:pad + oh, pad:pad + ow, pl.ds(c0, tco)]
        out = out + res.reshape(m, tco).astype(jnp.float32)

    out = jnp.maximum(out, 0.0)
    o_ref[...] = out.reshape(1, m, tco).astype(o_ref.dtype)


# ------------------------------ host wrapper ------------------------------- #

def conv2d_block(x, params, *, stride, padding, residual=False):
    """Pallas equivalent of syncnet Conv2d block (eval-mode BN folded).

    x: NHWC activations [N, H, W, C]; C may be the true cin or cin padded up
       to a multiple of 128 (padded channels are sliced off, so no zero-pad
       contract is required of external inputs).
    Returns NHWC [N, OH, OW, round_up(cout, 128)] bfloat16; channels beyond
    cout are zero, so blocks chain without re-slicing.
    """
    w = params["weight"]                        # (cout, cin, kh, kw)
    cout, cin, kh, kw = w.shape
    n, h, wd, c_have = x.shape
    assert c_have >= cin
    s = stride
    coutp = _round_up(cout, 128)

    # ---- fold conv bias + eval-mode BatchNorm into weight scale / bias ----
    eps = 1e-5
    scale = params["gamma"] / jnp.sqrt(params["running_var"] + eps)   # (cout,)
    bias = (params["bias"] - params["running_mean"]) * scale + params["beta"]

    # Weights as one 2-D (K, coutp) operand, K = kh*kw*cin padded once to 128.
    k_real = kh * kw * cin
    kp = _round_up(k_real, 128)
    wt = jnp.transpose(w, (2, 3, 1, 0)) * scale[None, None, None, :]  # (kh,kw,cin,cout)
    wt = wt.reshape(k_real, cout)
    wt = jnp.pad(wt, ((0, kp - k_real), (0, coutp - cout))).astype(jnp.bfloat16)
    bias_p = jnp.pad(bias, (0, coutp - cout)).reshape(1, coutp).astype(jnp.float32)

    # ---- activations: bf16, spatial pad, phase-pack, pad packed channels ----
    xb = x[..., :cin].astype(jnp.bfloat16)       # drop any caller channel pad
    hp, wp = h + 2 * padding, wd + 2 * padding
    oh = (hp - kh) // s + 1
    ow = (wp - kw) // s + 1
    hps = -(-hp // s)
    wps = -(-wp // s)
    xb = jnp.pad(xb, ((0, 0),
                      (padding, hps * s - h - padding),
                      (padding, wps * s - wd - padding),
                      (0, 0)))
    if s > 1:
        # pack the s*s spatial phases into channels so in-kernel taps are
        # plain (unstrided) shifted slices.
        xb = xb.reshape(n, hps, s, wps, s, cin)
        xb = xb.transpose(0, 1, 3, 2, 4, 5).reshape(n, hps, wps, s * s * cin)
    pc_real = s * s * cin
    phc = _round_up(pc_real, 128)                # pad AFTER phase packing
    if phc > pc_real:
        xb = jnp.pad(xb, ((0, 0), (0, 0), (0, 0), (0, phc - pc_real)))

    if residual:
        assert cin == cout and s == 1 and oh == h and ow == wd, \
            "residual requires shape-preserving conv"
    m = oh * ow

    # ---- cout tile: 256 on 256-wide MXU generations when possible ----
    tco = 256 if (coutp % 256 == 0 and _mxu_is_256_wide()) else 128
    nco = coutp // tco

    # ---- grid ordering: input-stationary vs weight-stationary ----
    w_bytes = kp * coutp * 2
    a_bytes = n * hps * wps * phc * 2
    input_stationary = (nco == 1 or n == 1
                        or n * w_bytes + a_bytes <= nco * a_bytes + w_bytes)
    if input_stationary:
        grid = (n, nco)
        co_axis = 1
        x_map = lambda b, co: (b, 0, 0, 0)
        w_map = lambda b, co: (0, co)
        s_map = lambda b, co: (0, co)
        o_map = lambda b, co: (b, 0, co)
        gate_build = nco > 1
        semantics = ("parallel", "arbitrary")     # keep cout axis on one core
    else:
        grid = (nco, n)
        co_axis = 0
        x_map = lambda co, b: (b, 0, 0, 0)
        w_map = lambda co, b: (0, co)
        s_map = lambda co, b: (0, co)
        o_map = lambda co, b: (b, 0, co)
        gate_build = False
        semantics = ("parallel", "parallel")

    kern = functools.partial(
        _conv_bn_act_kernel, kh=kh, kw=kw, stride=s, pad=padding,
        oh=oh, ow=ow, cin=cin, kp=kp, tco=tco,
        residual=residual, gate_build=gate_build, co_axis=co_axis)

    # ---- VMEM budget: double-buffered blocks + scratch + live temporaries ----
    blk_bytes = 2 * (hps * wps * phc * 2         # x block
                     + kp * tco * 2              # weight block
                     + tco * 4                   # bias block
                     + m * tco * 2)              # output block
    live_tmp = m * kp * 2 + m * tco * 4          # reshaped LHS + f32 dot result
    scratch_bytes = oh * ow * kp * 2
    needed = blk_bytes + scratch_bytes + live_tmp + (4 << 20)
    cap = max(int(0.75 * _vmem_capacity_bytes()), 16 << 20)
    vmem_limit = int(min(max(needed, 16 << 20), cap))

    if input_stationary:
        w_fetches, a_fetches = (1 if nco == 1 else n), 1
    else:
        w_fetches, a_fetches = 1, nco
    cost = pl.CostEstimate(
        flops=int(2 * n * m * kp * coutp),
        transcendentals=0,
        bytes_accessed=int(a_fetches * a_bytes + w_fetches * w_bytes
                           + n * m * coutp * 2))

    out = pl.pallas_call(
        kern,
        out_shape=jax.ShapeDtypeStruct((n, m, coutp), jnp.bfloat16),
        grid=grid,
        in_specs=[
            pl.BlockSpec((1, hps, wps, phc), x_map),
            pl.BlockSpec((kp, tco), w_map),
            pl.BlockSpec((1, tco), s_map),
        ],
        out_specs=pl.BlockSpec((1, m, tco), o_map),
        scratch_shapes=[pltpu.VMEM((oh, ow, kp), jnp.bfloat16)],
        compiler_params=pltpu.CompilerParams(
            dimension_semantics=semantics,
            vmem_limit_bytes=vmem_limit),
        cost_estimate=cost,
    )(xb, wt, bias_p)
    return out.reshape(n, oh, ow, coutp)


# --------------------------- deterministic params --------------------------- #

def init_params(key, cin, cout, kernel_size):
    kw_, kb = jax.random.split(key)
    fan_in = cin * kernel_size * kernel_size
    bound = 1.0 / np.sqrt(fan_in)
    return {
        "weight": jax.random.uniform(kw_, (cout, cin, kernel_size, kernel_size),
                                     jnp.float32, -bound, bound),
        "bias": jax.random.uniform(kb, (cout,), jnp.float32, -bound, bound),
        "gamma": jnp.ones((cout,), jnp.float32),
        "beta": jnp.zeros((cout,), jnp.float32),
        "running_mean": jnp.zeros((cout,), jnp.float32),
        "running_var": jnp.ones((cout,), jnp.float32),
    }


# -------------------------------- reference -------------------------------- #

def reference(x_nchw, params, *, stride, padding, residual):
    y = jax.lax.conv_general_dilated(
        x_nchw.astype(jnp.float32), params["weight"],
        window_strides=(stride, stride),
        padding=[(padding, padding), (padding, padding)],
        dimension_numbers=("NCHW", "OIHW", "NCHW"))
    y = y + params["bias"][None, :, None, None]
    eps = 1e-5
    scale = params["gamma"] / jnp.sqrt(params["running_var"] + eps)
    y = (y - params["running_mean"][None, :, None, None]) * scale[None, :, None, None] \
        + params["beta"][None, :, None, None]
    if residual:
        y = y + x_nchw
    return jnp.maximum(y, 0.0)


# ---------------------------------- main ------------------------------------ #

if __name__ == "__main__":
    key = jax.random.PRNGKey(0)
    k_x, k1, k2, k3 = jax.random.split(key, 4)

    # x: [N, Cin, H, W] (NCHW at the PyTorch boundary)
    N, CIN, H, W = 2, 4, 16, 16
    x = jax.random.normal(k_x, (N, CIN, H, W), jnp.float32)

    p1 = init_params(k1, 4, 8, 3)    # Conv2d(4 -> 8,  k=3, s=1, p=1)
    p2 = init_params(k2, 8, 8, 3)    # Conv2d(8 -> 8,  k=3, s=1, p=1, residual)
    p3 = init_params(k3, 8, 16, 5)   # Conv2d(8 -> 16, k=5, s=2, p=2)

    # One NCHW -> NHWC layout change at the boundary; NHWC (channel-padded)
    # activations chain between blocks without further transposes.
    x_nhwc = jnp.transpose(x, (0, 2, 3, 1))

    y1 = conv2d_block(x_nhwc, p1, stride=1, padding=1, residual=False)
    y2 = conv2d_block(y1, p2, stride=1, padding=1, residual=True)
    y3 = conv2d_block(y2, p3, stride=2, padding=2, residual=False)
    y3 = jax.block_until_ready(y3)

    def to_nchw(y, cout):
        return jnp.transpose(y[..., :cout], (0, 3, 1, 2)).astype(jnp.float32)

    y1_nchw = to_nchw(y1, 8)
    y2_nchw = to_nchw(y2, 8)
    y3_nchw = to_nchw(y3, 16)

    # bf16 activations/weights => compare against f32 reference with matching
    # tolerance; blocks 2/3 are validated against the reference applied to the
    # kernel's own previous-block output (isolates per-block error).
    r1 = reference(x, p1, stride=1, padding=1, residual=False)
    np.testing.assert_allclose(np.asarray(y1_nchw), np.asarray(r1),
                               rtol=5e-2, atol=5e-2)
    r2 = reference(y1_nchw, p2, stride=1, padding=1, residual=True)
    np.testing.assert_allclose(np.asarray(y2_nchw), np.asarray(r2),
                               rtol=5e-2, atol=5e-2)
    r3 = reference(y2_nchw, p3, stride=2, padding=2, residual=False)
    np.testing.assert_allclose(np.asarray(y3_nchw), np.asarray(r3),
                               rtol=5e-2, atol=5e-2)

    print("KERNEL_OK")
</pallas_src>

<mosaic_0001>
module attributes {stable_mosaic.version = 11 : i64} {
  func.func @_conv_bn_act_kernel(%arg0: i32, %arg1: i32, %arg2: memref<1x18x18x128xbf16, #tpu.memory_space<vmem>>, %arg3: memref<128x128xbf16, #tpu.memory_space<vmem>>, %arg4: memref<1x128xf32, #tpu.memory_space<vmem>>, %arg5: memref<1x256x128xbf16, #tpu.memory_space<vmem>>, %arg6: memref<16x16x128xbf16, #tpu.memory_space<vmem>>) attributes {dimension_semantics = [#tpu.dimension_semantics<parallel>, #tpu.dimension_semantics<arbitrary>], iteration_bounds = array<i64: 2, 1>, scalar_prefetch = 0 : i64, scratch_operands = 1 : i64, tpu.core_type = #tpu.core_type<tc>, window_params = [{transform_indices = @transform_0, window_bounds = array<i64: 1, 18, 18, 128>}, {transform_indices = @transform_1, window_bounds = array<i64: 128, 128>}, {transform_indices = @transform_2, window_bounds = array<i64: 1, 128>}, {transform_indices = @transform_3, window_bounds = array<i64: 1, 256, 128>}]} {
    %c0 = arith.constant 0 : index
    %c0_0 = arith.constant 0 : index
    %c0_1 = arith.constant 0 : index
    %c0_2 = arith.constant 0 : index
    %0 = vector.load %arg2[%c0, %c0_0, %c0_1, %c0_2] : memref<1x18x18x128xbf16, #tpu.memory_space<vmem>>, vector<1x16x16x4xbf16>
    %1 = vector.shape_cast %0 : vector<1x16x16x4xbf16> to vector<16x16x4xbf16>
    %c0_3 = arith.constant 0 : index
    %c0_4 = arith.constant 0 : index
    %c0_5 = arith.constant 0 : index
    %2 = vector.load %arg6[%c0_3, %c0_4, %c0_5] : memref<16x16x128xbf16, #tpu.memory_space<vmem>>, vector<16x16x4xbf16>
    tpu.vector_store %arg6[%c0_3, %c0_4, %c0_5], %1 {strides = array<i32>} : memref<16x16x128xbf16, #tpu.memory_space<vmem>>, vector<16x16x4xbf16>,
    %c0_6 = arith.constant 0 : index
    %c0_7 = arith.constant 0 : index
    %c1 = arith.constant 1 : index
    %c0_8 = arith.constant 0 : index
    %3 = vector.load %arg2[%c0_6, %c0_7, %c1, %c0_8] : memref<1x18x18x128xbf16, #tpu.memory_space<vmem>>, vector<1x16x16x4xbf16>
    %4 = vector.shape_cast %3 : vector<1x16x16x4xbf16> to vector<16x16x4xbf16>
    %c0_9 = arith.constant 0 : index
    %c0_10 = arith.constant 0 : index
    %c4 = arith.constant 4 : index
    %5 = vector.load %arg6[%c0_9, %c0_10, %c4] : memref<16x16x128xbf16, #tpu.memory_space<vmem>>, vector<16x16x4xbf16>
    tpu.vector_store %arg6[%c0_9, %c0_10, %c4], %4 {strides = array<i32>} : memref<16x16x128xbf16, #tpu.memory_space<vmem>>, vector<16x16x4xbf16>,
    %c0_11 = arith.constant 0 : index
    %c0_12 = arith.constant 0 : index
    %c2 = arith.constant 2 : index
    %c0_13 = arith.constant 0 : index
    %6 = vector.load %arg2[%c0_11, %c0_12, %c2, %c0_13] : memref<1x18x18x128xbf16, #tpu.memory_space<vmem>>, vector<1x16x16x4xbf16>
    %7 = vector.shape_cast %6 : vector<1x16x16x4xbf16> to vector<16x16x4xbf16>
    %c0_14 = arith.constant 0 : index
    %c0_15 = arith.constant 0 : index
    %c8 = arith.constant 8 : index
    %8 = vector.load %arg6[%c0_14, %c0_15, %c8] : memref<16x16x128xbf16, #tpu.memory_space<vmem>>, vector<16x16x4xbf16>
    tpu.vector_store %arg6[%c0_14, %c0_15, %c8], %7 {strides = array<i32>} : memref<16x16x128xbf16, #tpu.memory_space<vmem>>, vector<16x16x4xbf16>,
    %c0_16 = arith.constant 0 : index
    %c1_17 = arith.constant 1 : index
    %c0_18 = arith.constant 0 : index
    %c0_19 = arith.constant 0 : index
    %9 = vector.load %arg2[%c0_16, %c1_17, %c0_18, %c0_19] : memref<1x18x18x128xbf16, #tpu.memory_space<vmem>>, vector<1x16x16x4xbf16>
    %10 = vector.shape_cast %9 : vector<1x16x16x4xbf16> to vector<16x16x4xbf16>
    %c0_20 = arith.constant 0 : index
    %c0_21 = arith.constant 0 : index
    %c12 = arith.constant 12 : index
    %11 = vector.load %arg6[%c0_20, %c0_21, %c12] : memref<16x16x128xbf16, #tpu.memory_space<vmem>>, vector<16x16x4xbf16>
    tpu.vector_store %arg6[%c0_20, %c0_21, %c12], %10 {strides = array<i32>} : memref<16x16x128xbf16, #tpu.memory_space<vmem>>, vector<16x16x4xbf16>,
    %c0_22 = arith.constant 0 : index
    %c1_23 = arith.constant 1 : index
    %c1_24 = arith.constant 1 : index
    %c0_25 = arith.constant 0 : index
    %12 = vector.load %arg2[%c0_22, %c1_23, %c1_24, %c0_25] : memref<1x18x18x128xbf16, #tpu.memory_space<vmem>>, vector<1x16x16x4xbf16>
    %13 = vector.shape_cast %12 : vector<1x16x16x4xbf16> to vector<16x16x4xbf16>
    %c0_26 = arith.constant 0 : index
    %c0_27 = arith.constant 0 : index
    %c16 = arith.constant 16 : index
    %14 = vector.load %arg6[%c0_26, %c0_27, %c16] : memref<16x16x128xbf16, #tpu.memory_space<vmem>>, vector<16x16x4xbf16>
    tpu.vector_store %arg6[%c0_26, %c0_27, %c16], %13 {strides = array<i32>} : memref<16x16x128xbf16, #tpu.memory_space<vmem>>, vector<16x16x4xbf16>,
    %c0_28 = arith.constant 0 : index
    %c1_29 = arith.constant 1 : index
    %c2_30 = arith.constant 2 : index
    %c0_31 = arith.constant 0 : index
    %15 = vector.load %arg2[%c0_28, %c1_29, %c2_30, %c0_31] : memref<1x18x18x128xbf16, #tpu.memory_space<vmem>>, vector<1x16x16x4xbf16>
    %16 = vector.shape_cast %15 : vector<1x16x16x4xbf16> to vector<16x16x4xbf16>
    %c0_32 = arith.constant 0 : index
    %c0_33 = arith.constant 0 : index
    %c20 = arith.constant 20 : index
    %17 = vector.load %arg6[%c0_32, %c0_33, %c20] : memref<16x16x128xbf16, #tpu.memory_space<vmem>>, vector<16x16x4xbf16>
    tpu.vector_store %arg6[%c0_32, %c0_33, %c20], %16 {strides = array<i32>} : memref<16x16x128xbf16, #tpu.memory_space<vmem>>, vector<16x16x4xbf16>,
    %c0_34 = arith.constant 0 : index
    %c2_35 = arith.constant 2 : index
    %c0_36 = arith.constant 0 : index
    %c0_37 = arith.constant 0 : index
    %18 = vector.load %arg2[%c0_34, %c2_35, %c0_36, %c0_37] : memref<1x18x18x128xbf16, #tpu.memory_space<vmem>>, vector<1x16x16x4xbf16>
    %19 = vector.shape_cast %18 : vector<1x16x16x4xbf16> to vector<16x16x4xbf16>
    %c0_38 = arith.constant 0 : index
    %c0_39 = arith.constant 0 : index
    %c24 = arith.constant 24 : index
    %20 = vector.load %arg6[%c0_38, %c0_39, %c24] : memref<16x16x128xbf16, #tpu.memory_space<vmem>>, vector<16x16x4xbf16>
    tpu.vector_store %arg6[%c0_38, %c0_39, %c24], %19 {strides = array<i32>} : memref<16x16x128xbf16, #tpu.memory_space<vmem>>, vector<16x16x4xbf16>,
    %c0_40 = arith.constant 0 : index
    %c2_41 = arith.constant 2 : index
    %c1_42 = arith.constant 1 : index
    %c0_43 = arith.constant 0 : index
    %21 = vector.load %arg2[%c0_40, %c2_41, %c1_42, %c0_43] : memref<1x18x18x128xbf16, #tpu.memory_space<vmem>>, vector<1x16x16x4xbf16>
    %22 = vector.shape_cast %21 : vector<1x16x16x4xbf16> to vector<16x16x4xbf16>
    %c0_44 = arith.constant 0 : index
    %c0_45 = arith.constant 0 : index
    %c28 = arith.constant 28 : index
    %23 = vector.load %arg6[%c0_44, %c0_45, %c28] : memref<16x16x128xbf16, #tpu.memory_space<vmem>>, vector<16x16x4xbf16>
    tpu.vector_store %arg6[%c0_44, %c0_45, %c28], %22 {strides = array<i32>} : memref<16x16x128xbf16, #tpu.memory_space<vmem>>, vector<16x16x4xbf16>,
    %c0_46 = arith.constant 0 : index
    %c2_47 = arith.constant 2 : index
    %c2_48 = arith.constant 2 : index
    %c0_49 = arith.constant 0 : index
    %24 = vector.load %arg2[%c0_46, %c2_47, %c2_48, %c0_49] : memref<1x18x18x128xbf16, #tpu.memory_space<vmem>>, vector<1x16x16x4xbf16>
    %25 = vector.shape_cast %24 : vector<1x16x16x4xbf16> to vector<16x16x4xbf16>
    %c0_50 = arith.constant 0 : index
    %c0_51 = arith.constant 0 : index
    %c32 = arith.constant 32 : index
    %26 = vector.load %arg6[%c0_50, %c0_51, %c32] : memref<16x16x128xbf16, #tpu.memory_space<vmem>>, vector<16x16x4xbf16>
    tpu.vector_store %arg6[%c0_50, %c0_51, %c32], %25 {strides = array<i32>} : memref<16x16x128xbf16, #tpu.memory_space<vmem>>, vector<16x16x4xbf16>,
    %cst = arith.constant 0.000000e+00 : bf16
    %27 = vector.broadcast %cst : bf16 to vector<16x16x92xbf16>
    %c0_52 = arith.constant 0 : index
    %c0_53 = arith.constant 0 : index
    %c36 = arith.constant 36 : index
    %28 = vector.load %arg6[%c0_52, %c0_53, %c36] : memref<16x16x128xbf16, #tpu.memory_space<vmem>>, vector<16x16x92xbf16>
    tpu.vector_store %arg6[%c0_52, %c0_53, %c36], %27 {strides = array<i32>} : memref<16x16x128xbf16, #tpu.memory_space<vmem>>, vector<16x16x92xbf16>,
    %c0_54 = arith.constant 0 : index
    %c0_55 = arith.constant 0 : index
    %c0_56 = arith.constant 0 : index
    %29 = vector.load %arg6[%c0_54, %c0_55, %c0_56] : memref<16x16x128xbf16, #tpu.memory_space<vmem>>, vector<16x16x128xbf16>
    %30 = vector.shape_cast %29 : vector<16x16x128xbf16> to vector<256x128xbf16>
    %c0_57 = arith.constant 0 : index
    %c0_58 = arith.constant 0 : index
    %31 = vector.load %arg3[%c0_57, %c0_58] : memref<128x128xbf16, #tpu.memory_space<vmem>>, vector<128x128xbf16>
    %cst_59 = arith.constant dense<0.000000e+00> : vector<256x128xf32>
    %32 = tpu.matmul %30, %31, %cst_59 {dimension_numbers = #tpu.dot_dimension_numbers<[1], [0], [0], [1], [0, 0, 1, 1], [], []>} : vector<256x128xbf16>, vector<128x128xbf16>, vector<256x128xf32> -> vector<256x128xf32>
    %c0_60 = arith.constant 0 : index
    %c0_61 = arith.constant 0 : index
    %33 = vector.load %arg4[%c0_60, %c0_61] : memref<1x128xf32, #tpu.memory_space<vmem>>, vector<1x128xf32>
    %34 = vector.broadcast %33 : vector<1x128xf32> to vector<256x128xf32>
    %35 = arith.addf %32, %34 : vector<256x128xf32>
    %cst_62 = arith.constant 0.000000e+00 : f32
    %36 = vector.broadcast %cst_62 : f32 to vector<256x128xf32>
    %37 = arith.maximumf %35, %36 : vector<256x128xf32>
    %38 = vector.shape_cast %37 : vector<256x128xf32> to vector<1x256x128xf32>
    %39 = arith.truncf %38 : vector<1x256x128xf32> to vector<1x256x128xbf16>
    %c0_63 = arith.constant 0 : index
    %c0_64 = arith.constant 0 : index
    %c0_65 = arith.constant 0 : index
    %40 = vector.load %arg5[%c0_63, %c0_64, %c0_65] : memref<1x256x128xbf16, #tpu.memory_space<vmem>>, vector<1x256x128xbf16>
    tpu.vector_store %arg5[%c0_63, %c0_64, %c0_65], %39 {strides = array<i32>} : memref<1x256x128xbf16, #tpu.memory_space<vmem>>, vector<1x256x128xbf16>,
    return
  }
  func.func @transform_0(%arg0: i32, %arg1: i32) -> (i32, i32, i32, i32) {
    %c0_i32 = arith.constant 0 : i32
    %c0_i32_0 = arith.constant 0 : i32
    %c0_i32_1 = arith.constant 0 : i32
    %c0_i32_2 = arith.constant 0 : i32
    return %arg0, %c0_i32, %c0_i32_0, %c0_i32_1 : i32, i32, i32, i32
  }
  func.func @transform_1(%arg0: i32, %arg1: i32) -> (i32, i32) {
    %c0_i32 = arith.constant 0 : i32
    %c0_i32_0 = arith.constant 0 : i32
    return %c0_i32, %arg1 : i32, i32
  }
  func.func @transform_2(%arg0: i32, %arg1: i32) -> (i32, i32) {
    %c0_i32 = arith.constant 0 : i32
    %c0_i32_0 = arith.constant 0 : i32
    return %c0_i32, %arg1 : i32, i32
  }
  func.func @transform_3(%arg0: i32, %arg1: i32) -> (i32, i32, i32) {
    %c0_i32 = arith.constant 0 : i32
    %c0_i32_0 = arith.constant 0 : i32
    return %arg0, %c0_i32, %arg1 : i32, i32, i32
  }
}

</mosaic_0001>

<llo_original>
// kernel: tpu_custom_call.1
$region0: #{tpu_custom_call.1}
  #allocation0 [shape = 'u32[]', space=smem, size = 0x4, offset = 0x4, fixed_abs, tag = 'smem constant byte address 0x4 - core index']
  #allocation1 [shape = 'u32[144,128]{1,0:T(1,128)}', space=vmem, size = 0x12000, scoped, tag = 'internal scratch']
  #allocation2 [shape = 'bf16[16,16,128]{2,1,0:T(16,128)(2,1)}', space=vmem, size = 0x10000, scoped, tag = 'scratch operand']
  %s0 = inlined_call_operand.vmem [shape: bf16[2,18,18,128], index: 0, kind: input, shape index: {}]
  %s1 = inlined_call_operand.vmem [shape: bf16[128,128], index: 1, kind: input, shape index: {}]
  %s2 = inlined_call_operand.vmem [shape: f32[1,128], index: 2, kind: input, shape index: {}]
  %s3 = inlined_call_operand.hbm [shape: bf16[2,256,128], index: 3, kind: output, shape index: {}]
  %s4 = sld [smem:[#allocation0]]
  $region45: #{tpu_custom_call.1} parent=0
    _
  %s6 = ssub.s32 1, %s4
  %s7 = scalar_select 0, %s6, %s4
  $region1: #{tpu_custom_call.1} parent=0
    #allocation3 [shape = 'u8[131072]{0}', space=vmem, size = 0x20000, scoped, tag = 'output window, operand 0']
    #allocation4 [shape = 's32[2]{0}', space=sflag, size = 0x8, scoped, tag = 'scoped memory for tpu_custom_call.1']
    %8 = vsyncpa [#allocation4], 0
    %s9 = scalar_lea.sflag [#allocation4], 1
    %10 = vsyncpa %s9, 0
    loop: start=0, step=1, limit=4
    $region2: #{tpu_custom_call.1} parent=1 // loop_pre_header
      _
    $region3: #{tpu_custom_call.1} parent=1 // loop_header
      %s12 = sphi 0, %s16
      %p13 = scmp.ge.s32.totalorder %s12, 4
      %s19 = sphi 0, %s31
      %s20 = sphi 0, %s27
      %s21 = sphi 0, %s19
      %s22 = sphi 0, %s20
      %s23 = sphi 0, %s21
      %s24 = sphi 0, %s22
      %s34 = sphi 0, %s36
      %s37 = sphi 0, %s34
      %s38 = sphi 0, %s37
      %s54 = sphi 0, %s38
      %s60 = sphi 0, %s62
      %s63 = sphi 0, %s60
      %s64 = sphi 0, %s63
      %s80 = sphi 0, %s64
      %s86 = sphi 0, %s88
      %s89 = sphi 0, %s86
      %s90 = sphi 0, %s89
      %s106 = sphi 0, %s90
      %s114 = sphi 0, %s116
      %s117 = sphi 0, %s114
      %s118 = sphi 0, %s117
      %s134 = sphi 0, %s118
    $region4: #{tpu_custom_call.1} parent=1 // loop_header_branch
      %15 = sbr.rel (%p13) target = $region8
    $region5: #{tpu_custom_call.1} parent=1 // loop_body
      %s17 = ssub.s32 %s12, 1
      %s18 = ssub.s32 %s12, 2
      %s25 = sadd.s32 1, %s20
      %p26 = scmp.ge.s32.totalorder %s25, 1
      %s27 = scalar_select %p26, 0, %s25
      %s28 = sadd.s32 1, %s19
      %s29 = scalar_select %p26, %s28, %s19
      %p30 = scmp.ge.s32.totalorder %s29, 2
      %s31 = scalar_select %p30, 0, %s29
      %s32 = ssub.s32 %s19, %s31
      %p33 = scmp.eq.s32.totalorder %s32, 0
      %s35 = sadd.s32 %s34, 1
      %s36 = scalar_select %p33, %s34, %s35
      %p39 = pneg %p33
      %p40 = scmp.eq.s32.totalorder %s12, 1
      %p41 = por %p39, %p40
      %p42 = scmp.ne.s32.totalorder %s34, %s37
      %p43 = scmp.eq.s32.totalorder %s12, 0
      %p44 = por %p42, %p43
      %p45 = scmp.ne.s32.totalorder %s34, %s37
      %p46 = scmp.eq.s32.totalorder %s17, 1
      %p47 = por %p45, %p46
      %p48 = scmp.ne.s32.totalorder %s37, %s38
      %p49 = scmp.eq.s32.totalorder %s17, 0
      %p50 = por %p48, %p49
      %p51 = scmp.ne.s32.totalorder %s37, %s38
      %p52 = scmp.eq.s32.totalorder %s18, 1
      %p53 = por %p51, %p52
      %p55 = scmp.ne.s32.totalorder %s38, %s54
      %p56 = scmp.eq.s32.totalorder %s18, 0
      %p57 = por %p55, %p56
      %s58 = ssub.s32 %s20, %s27
      %p59 = scmp.eq.s32.totalorder %s58, 0
      %s61 = sadd.s32 %s60, 1
      %s62 = scalar_select %p59, %s60, %s61
      %p65 = pneg %p59
      %p66 = scmp.eq.s32.totalorder %s12, 1
      %p67 = por %p65, %p66
      %p68 = scmp.ne.s32.totalorder %s60, %s63
      %p69 = scmp.eq.s32.totalorder %s12, 0
      %p70 = por %p68, %p69
      %p71 = scmp.ne.s32.totalorder %s60, %s63
      %p72 = scmp.eq.s32.totalorder %s17, 1
      %p73 = por %p71, %p72
      %p74 = scmp.ne.s32.totalorder %s63, %s64
      %p75 = scmp.eq.s32.totalorder %s17, 0
      %p76 = por %p74, %p75
      %p77 = scmp.ne.s32.totalorder %s63, %s64
      %p78 = scmp.eq.s32.totalorder %s18, 1
      %p79 = por %p77, %p78
      %p81 = scmp.ne.s32.totalorder %s64, %s80
      %p82 = scmp.eq.s32.totalorder %s18, 0
      %p83 = por %p81, %p82
      %s84 = ssub.s32 %s20, %s27
      %p85 = scmp.eq.s32.totalorder %s84, 0
      %s87 = sadd.s32 %s86, 1
      %s88 = scalar_select %p85, %s86, %s87
      %p91 = pneg %p85
      %p92 = scmp.eq.s32.totalorder %s12, 1
      %p93 = por %p91, %p92
      %p94 = scmp.ne.s32.totalorder %s86, %s89
      %p95 = scmp.eq.s32.totalorder %s12, 0
      %p96 = por %p94, %p95
      %p97 = scmp.ne.s32.totalorder %s86, %s89
      %p98 = scmp.eq.s32.totalorder %s17, 1
      %p99 = por %p97, %p98
      %p100 = scmp.ne.s32.totalorder %s89, %s90
      %p101 = scmp.eq.s32.totalorder %s17, 0
      %p102 = por %p100, %p101
      %p103 = scmp.ne.s32.totalorder %s89, %s90
      %p104 = scmp.eq.s32.totalorder %s18, 1
      %p105 = por %p103, %p104
      %p107 = scmp.ne.s32.totalorder %s90, %s106
      %p108 = scmp.eq.s32.totalorder %s18, 0
      %p109 = por %p107, %p108
      %s110 = ssub.s32 %s19, %s31
      %s111 = ssub.s32 %s20, %s27
      %s112 = sor.u32 %s110, %s111
      %p113 = scmp.eq.s32.totalorder %s112, 0
      %s115 = sadd.s32 %s114, 1
      %s116 = scalar_select %p113, %s114, %s115
      %p119 = pneg %p113
      %p120 = scmp.eq.s32.totalorder %s12, 1
      %p121 = por %p119, %p120
      %p122 = scmp.ne.s32.totalorder %s114, %s117
      %p123 = scmp.eq.s32.totalorder %s12, 0
      %p124 = por %p122, %p123
      %p125 = scmp.ne.s32.totalorder %s114, %s117
      %p126 = scmp.eq.s32.totalorder %s17, 1
      %p127 = por %p125, %p126
      %p128 = scmp.ne.s32.totalorder %s117, %s118
      %p129 = scmp.eq.s32.totalorder %s17, 0
      %p130 = por %p128, %p129
      %p131 = scmp.ne.s32.totalorder %s117, %s118
      %p132 = scmp.eq.s32.totalorder %s18, 1
      %p133 = por %p131, %p132
      %p135 = scmp.ne.s32.totalorder %s118, %s134
      %p136 = scmp.eq.s32.totalorder %s18, 0
      %p137 = por %p135, %p136
      %p138 = scmp.le.s32.totalorder 1, %s12
      %p139 = scmp.lt.s32.totalorder %s12, 3
      %p140 = pnand %p138, %p139
      %p141 = pneg %p140
      // Predicated region
      $region9: #{tpu_custom_call.1} parent=5 // pred_check
        _
      $region10: #{tpu_custom_call.1} parent=5 // pred_check_branch
        %143 = sbr.rel (%p140) target = $region12
      $region11: #{tpu_custom_call.1} parent=5 // pred_region
        %s144 = ssub.s32 %s12, 1
        // Predicated region
        $region13: #{tpu_custom_call.1} parent=11 // pred_check
          %p145 = pneg %p76
        $region14: #{tpu_custom_call.1} parent=11 // pred_check_branch
          %147 = sbr.rel (%p145) target = $region16
        $region15: #{tpu_custom_call.1} parent=11 // pred_region
          %p148 = scmp.lt.s32.totalorder %s22, 0
          %s149 = scalar_select %p148, %s22, 0
          %s150 = smul.addr %s149, 4
          %s151 = scalar_lea.vmem %s1, %s150
        $region16: #{tpu_custom_call.1} parent=11 // pred_fallthru
          _
        // Predicated region
        $region17: #{tpu_custom_call.1} parent=11 // pred_check
          %p152 = pneg %p102
        $region18: #{tpu_custom_call.1} parent=11 // pred_check_branch
          %154 = sbr.rel (%p152) target = $region20
        $region19: #{tpu_custom_call.1} parent=11 // pred_region
          %p155 = scmp.lt.s32.totalorder %s22, 0
          %s156 = scalar_select %p155, %s22, 0
          %s157 = scalar_lea.vmem %s2, %s156
        $region20: #{tpu_custom_call.1} parent=11 // pred_fallthru
          _
      $region12: #{tpu_custom_call.1} parent=5 // pred_fallthru
        _
      %p158 = scmp.lt.s32.totalorder %s12, 2
      // Predicated region
      $region21: #{tpu_custom_call.1} parent=5 // pred_check
        %p159 = pneg %p158
      $region22: #{tpu_custom_call.1} parent=5 // pred_check_branch
        %161 = sbr.rel (%p159) target = $region24
      $region23: #{tpu_custom_call.1} parent=5 // pred_region
        // Predicated region
        $region25: #{tpu_custom_call.1} parent=23 // pred_check
          %p162 = pneg %p44
        $region26: #{tpu_custom_call.1} parent=23 // pred_check_branch
          %164 = sbr.rel (%p162) target = $region28
        $region27: #{tpu_custom_call.1} parent=23 // pred_region
          %p165 = scmp.lt.s32.totalorder %s19, 1
          %s166 = scalar_select %p165, %s19, 1
          %s167 = smul.addr %s166, 54
          %s168 = smul.addr %s167, 4
          %s169 = scalar_lea.vmem %s0, %s168
        $region28: #{tpu_custom_call.1} parent=23 // pred_fallthru
          _
      $region24: #{tpu_custom_call.1} parent=5 // pred_fallthru
        _
      %p170 = scmp.le.s32.totalorder 1, %s12
      %p171 = scmp.lt.s32.totalorder %s12, 3
      %p172 = pnand %p170, %p171
      %p173 = pneg %p172
      // Predicated region
      $region29: #{tpu_custom_call.1} parent=5 // pred_check
        _
      $region30: #{tpu_custom_call.1} parent=5 // pred_check_branch
        %175 = sbr.rel (%p172) target = $region32
      $region31: #{tpu_custom_call.1} parent=5 // pred_region
        %s176 = ssub.s32 %s12, 1
        %p177 = scmp.lt.s32.totalorder %s21, 1
        %s178 = scalar_select %p177, %s21, 1
        %s179 = smul.addr %s178, 54
        %s180 = smul.addr %s179, 4
        %s181 = scalar_lea.vmem %s0, %s180
        %p182 = pneg %p50
        %p183 = pneg %p47
        %p184 = scmp.lt.s32.totalorder %s22, 0
        %s185 = scalar_select %p184, %s22, 0
        %s186 = smul.addr %s185, 4
        %s187 = scalar_lea.vmem %s1, %s186
        %p188 = pneg %p76
        %p189 = pneg %p73
        %p190 = scmp.lt.s32.totalorder %s22, 0
        %s191 = scalar_select %p190, %s22, 0
        %s192 = scalar_lea.vmem %s2, %s191
        %p193 = pneg %p102
        %p194 = pneg %p99
        %p195 = pneg %p130
        %p196 = pneg %p127
        %s197 = sand.u32 %s117, 1
        %s198 = scalar_lea.sflag [#allocation4], %s197
        %s199 = sand.u32 %s117, 1
        %s200 = smul.addr %s199, 128
        %s201 = scalar_lea.vmem [#allocation3], %s200
        %p202 = scmp.lt.s32.totalorder %s21, 1
        %s203 = scalar_select %p202, %s21, 1
        %s204 = smul.addr %s203, 54
        %s205 = smul.addr %s204, 4
        %s206 = scalar_lea.vmem %s0, %s205
        %p207 = scmp.lt.s32.totalorder %s22, 0
        %s208 = scalar_select %p207, %s22, 0
        %s209 = smul.addr %s208, 4
        %s210 = scalar_lea.vmem %s1, %s209
        %p211 = scmp.lt.s32.totalorder %s22, 0
        %s212 = scalar_select %p211, %s22, 0
        %s213 = scalar_lea.vmem %s2, %s212
        %v215 = vld [vmem:[%s206] sm:$0xf]
        %v216 = vld [vmem:[%s206 + $0x4] sm:$0xf]
        %v217 = vld [vmem:[%s206 + $0xc] sm:$0xf]
        %v218 = vld [vmem:[%s206 + $0x10] sm:$0xf]
        %v219 = vld [vmem:[%s206 + $0x18] sm:$0xf]
        %v220 = vld [vmem:[%s206 + $0x1c] sm:$0xf]
        %v221 = vld [vmem:[%s206 + $0x24] sm:$0xf]
        %v222 = vld [vmem:[%s206 + $0x28] sm:$0xf]
        %v223 = vld [vmem:[%s206 + $0x30] sm:$0xf]
        %v224 = vld [vmem:[%s206 + $0x34] sm:$0xf]
        %v225 = vld [vmem:[%s206 + $0x3c] sm:$0xf]
        %v226 = vld [vmem:[%s206 + $0x40] sm:$0xf]
        %v227 = vld [vmem:[%s206 + $0x48] sm:$0xf]
        %v228 = vld [vmem:[%s206 + $0x4c] sm:$0xf]
        %v229 = vld [vmem:[%s206 + $0x54] sm:$0xf]
        %v230 = vld [vmem:[%s206 + $0x58] sm:$0xf]
        %v231 = vld [vmem:[%s206 + $0x60] sm:$0xf]
        %v232 = vld [vmem:[%s206 + $0x64] sm:$0xf]
        %v233 = vld [vmem:[%s206 + $0x6c] sm:$0xf]
        %v234 = vld [vmem:[%s206 + $0x70] sm:$0xf]
        %v235 = vld [vmem:[%s206 + $0x78] sm:$0xf]
        %v236 = vld [vmem:[%s206 + $0x7c] sm:$0xf]
        %v237 = vld [vmem:[%s206 + $0x84] sm:$0xf]
        %v238 = vld [vmem:[%s206 + $0x88] sm:$0xf]
        %v239 = vld [vmem:[%s206 + $0x90] sm:$0xf]
        %v240 = vld [vmem:[%s206 + $0x94] sm:$0xf]
        %v241 = vld [vmem:[%s206 + $0x9c] sm:$0xf]
        %v242 = vld [vmem:[%s206 + $0xa0] sm:$0xf]
        %v243 = vld [vmem:[%s206 + $0xa8] sm:$0xf]
        %v244 = vld [vmem:[%s206 + $0xac] sm:$0xf]
        %v245 = vld [vmem:[%s206 + $0xb4] sm:$0xf]
        %v246 = vld [vmem:[%s206 + $0xb8] sm:$0xf]
        %v279 = vunpack.c.l.b16 %v215
        %v280 = vunpack.c.l.b16 %v216
        %v281 = vunpack.c.l.b16 %v217
        %v282 = vunpack.c.l.b16 %v218
        %v283 = vunpack.c.l.b16 %v219
        %v284 = vunpack.c.l.b16 %v220
        %v285 = vunpack.c.l.b16 %v221
        %v286 = vunpack.c.l.b16 %v222
        %v287 = vunpack.c.l.b16 %v223
        %v288 = vunpack.c.l.b16 %v224
        %v289 = vunpack.c.l.b16 %v225
        %v290 = vunpack.c.l.b16 %v226
        %v291 = vunpack.c.l.b16 %v227
        %v292 = vunpack.c.l.b16 %v228
        %v293 = vunpack.c.l.b16 %v229
        %v294 = vunpack.c.l.b16 %v230
        %v295 = vunpack.c.l.b16 %v231
        %v296 = vunpack.c.l.b16 %v232
        %v297 = vunpack.c.l.b16 %v233
        %v298 = vunpack.c.l.b16 %v234
        %v299 = vunpack.c.l.b16 %v235
        %v300 = vunpack.c.l.b16 %v236
        %v301 = vunpack.c.l.b16 %v237
        %v302 = vunpack.c.l.b16 %v238
        %v303 = vunpack.c.l.b16 %v239
        %v304 = vunpack.c.l.b16 %v240
        %v305 = vunpack.c.l.b16 %v241
        %v306 = vunpack.c.l.b16 %v242
        %v307 = vunpack.c.l.b16 %v243
        %v308 = vunpack.c.l.b16 %v244
        %v309 = vunpack.c.l.b16 %v245
        %v310 = vunpack.c.l.b16 %v246
        %v311 = vpack.c.b16 %v280, %v279
        %v312 = vpack.c.b16 %v282, %v281
        %v313 = vpack.c.b16 %v284, %v283
        %v314 = vpack.c.b16 %v286, %v285
        %v315 = vpack.c.b16 %v288, %v287
        %v316 = vpack.c.b16 %v290, %v289
        %v317 = vpack.c.b16 %v292, %v291
        %v318 = vpack.c.b16 %v294, %v293
        %v319 = vpack.c.b16 %v296, %v295
        %v320 = vpack.c.b16 %v298, %v297
        %v321 = vpack.c.b16 %v300, %v299
        %v322 = vpack.c.b16 %v302, %v301
        %v323 = vpack.c.b16 %v304, %v303
        %v324 = vpack.c.b16 %v306, %v305
        %v325 = vpack.c.b16 %v308, %v307
        %v326 = vpack.c.b16 %v310, %v309
        %vm343 = vcmask 31744
        %344 = vst.msk [vmem:[#allocation2] sm:$0xff] %vm343, %v311
        %345 = vst.msk [vmem:[#allocation2 + $0x8] sm:$0xff] %vm343, %v312
        %346 = vst.msk [vmem:[#allocation2 + $0x10] sm:$0xff] %vm343, %v313
        %347 = vst.msk [vmem:[#allocation2 + $0x18] sm:$0xff] %vm343, %v314
        %348 = vst.msk [vmem:[#allocation2 + $0x20] sm:$0xff] %vm343, %v315
        %349 = vst.msk [vmem:[#allocation2 + $0x28] sm:$0xff] %vm343, %v316
        %350 = vst.msk [vmem:[#allocation2 + $0x30] sm:$0xff] %vm343, %v317
        %351 = vst.msk [vmem:[#allocation2 + $0x38] sm:$0xff] %vm343, %v318
        %352 = vst.msk [vmem:[#allocation2 + $0x40] sm:$0xff] %vm343, %v319
        %353 = vst.msk [vmem:[#allocation2 + $0x48] sm:$0xff] %vm343, %v320
        %354 = vst.msk [vmem:[#allocation2 + $0x50] sm:$0xff] %vm343, %v321
        %355 = vst.msk [vmem:[#allocation2 + $0x58] sm:$0xff] %vm343, %v322
        %356 = vst.msk [vmem:[#allocation2 + $0x60] sm:$0xff] %vm343, %v323
        %357 = vst.msk [vmem:[#allocation2 + $0x68] sm:$0xff] %vm343, %v324
        %358 = vst.msk [vmem:[#allocation2 + $0x70] sm:$0xff] %vm343, %v325
        %359 = vst.msk [vmem:[#allocation2 + $0x78] sm:$0xff] %vm343, %v326
        %v360 = vld [vmem:[%s206] sm:$0xf]
        %v361 = vld [vmem:[%s206 + $0x4] sm:$0xf]
        %v362 = vld [vmem:[%s206 + $0x8] sm:$0x1]
        %v363 = vld [vmem:[%s206 + $0xc] sm:$0xf]
        %v364 = vld [vmem:[%s206 + $0x10] sm:$0xf]
        %v365 = vld [vmem:[%s206 + $0x14] sm:$0x1]
        %v366 = vld [vmem:[%s206 + $0x18] sm:$0xf]
        %v367 = vld [vmem:[%s206 + $0x1c] sm:$0xf]
        %v368 = vld [vmem:[%s206 + $0x20] sm:$0x1]
        %v369 = vld [vmem:[%s206 + $0x24] sm:$0xf]
        %v370 = vld [vmem:[%s206 + $0x28] sm:$0xf]
        %v371 = vld [vmem:[%s206 + $0x2c] sm:$0x1]
        %v372 = vld [vmem:[%s206 + $0x30] sm:$0xf]
        %v373 = vld [vmem:[%s206 + $0x34] sm:$0xf]
        %v374 = vld [vmem:[%s206 + $0x38] sm:$0x1]
        %v375 = vld [vmem:[%s206 + $0x3c] sm:$0xf]
        %v376 = vld [vmem:[%s206 + $0x40] sm:$0xf]
        %v377 = vld [vmem:[%s206 + $0x44] sm:$0x1]
        %v378 = vld [vmem:[%s206 + $0x48] sm:$0xf]
        %v379 = vld [vmem:[%s206 + $0x4c] sm:$0xf]
        %v380 = vld [vmem:[%s206 + $0x50] sm:$0x1]
        %v381 = vld [vmem:[%s206 + $0x54] sm:$0xf]
        %v382 = vld [vmem:[%s206 + $0x58] sm:$0xf]
        %v383 = vld [vmem:[%s206 + $0x5c] sm:$0x1]
        %v384 = vld [vmem:[%s206 + $0x60] sm:$0xf]
        %v385 = vld [vmem:[%s206 + $0x64] sm:$0xf]
        %v386 = vld [vmem:[%s206 + $0x68] sm:$0x1]
        %v387 = vld [vmem:[%s206 + $0x6c] sm:$0xf]
        %v388 = vld [vmem:[%s206 + $0x70] sm:$0xf]
        %v389 = vld [vmem:[%s206 + $0x74] sm:$0x1]
        %v390 = vld [vmem:[%s206 + $0x78] sm:$0xf]
        %v391 = vld [vmem:[%s206 + $0x7c] sm:$0xf]
        %v392 = vld [vmem:[%s206 + $0x80] sm:$0x1]
        %v393 = vld [vmem:[%s206 + $0x84] sm:$0xf]
        %v394 = vld [vmem:[%s206 + $0x88] sm:$0xf]
        %v395 = vld [vmem:[%s206 + $0x8c] sm:$0x1]
        %v396 = vld [vmem:[%s206 + $0x90] sm:$0xf]
        %v397 = vld [vmem:[%s206 + $0x94] sm:$0xf]
        %v398 = vld [vmem:[%s206 + $0x98] sm:$0x1]
        %v399 = vld [vmem:[%s206 + $0x9c] sm:$0xf]
        %v400 = vld [vmem:[%s206 + $0xa0] sm:$0xf]
        %v401 = vld [vmem:[%s206 + $0xa4] sm:$0x1]
        %v402 = vld [vmem:[%s206 + $0xa8] sm:$0xf]
        %v403 = vld [vmem:[%s206 + $0xac] sm:$0xf]
        %v404 = vld [vmem:[%s206 + $0xb0] sm:$0x1]
        %v405 = vld [vmem:[%s206 + $0xb4] sm:$0xf]
        %v406 = vld [vmem:[%s206 + $0xb8] sm:$0xf]
        %v407 = vld [vmem:[%s206 + $0xbc] sm:$0x1]
        %v456 = vunpack.c.l.b16 %v360
        %v457 = vunpack.c.l.b16 %v361
        %v458 = vunpack.c.l.b16 %v362
        %v459 = vunpack.c.l.b16 %v363
        %v460 = vunpack.c.l.b16 %v364
        %v461 = vunpack.c.l.b16 %v365
        %v462 = vunpack.c.l.b16 %v366
        %v463 = vunpack.c.l.b16 %v367
        %v464 = vunpack.c.l.b16 %v368
        %v465 = vunpack.c.l.b16 %v369
        %v466 = vunpack.c.l.b16 %v370
        %v467 = vunpack.c.l.b16 %v371
        %v468 = vunpack.c.l.b16 %v372
        %v469 = vunpack.c.l.b16 %v373
        %v470 = vunpack.c.l.b16 %v374
        %v471 = vunpack.c.l.b16 %v375
        %v472 = vunpack.c.l.b16 %v376
        %v473 = vunpack.c.l.b16 %v377
        %v474 = vunpack.c.l.b16 %v378
        %v475 = vunpack.c.l.b16 %v379
        %v476 = vunpack.c.l.b16 %v380
        %v477 = vunpack.c.l.b16 %v381
        %v478 = vunpack.c.l.b16 %v382
        %v479 = vunpack.c.l.b16 %v383
        %v480 = vunpack.c.l.b16 %v384
        %v481 = vunpack.c.l.b16 %v385
        %v482 = vunpack.c.l.b16 %v386
        %v483 = vunpack.c.l.b16 %v387
        %v484 = vunpack.c.l.b16 %v388
        %v485 = vunpack.c.l.b16 %v389
        %v486 = vunpack.c.l.b16 %v390
        %v487 = vunpack.c.l.b16 %v391
        %v488 = vunpack.c.l.b16 %v392
        %v489 = vunpack.c.l.b16 %v393
        %v490 = vunpack.c.l.b16 %v394
        %v491 = vunpack.c.l.b16 %v395
        %v492 = vunpack.c.l.b16 %v396
        %v493 = vunpack.c.l.b16 %v397
        %v494 = vunpack.c.l.b16 %v398
        %v495 = vunpack.c.l.b16 %v399
        %v496 = vunpack.c.l.b16 %v400
        %v497 = vunpack.c.l.b16 %v401
        %v498 = vunpack.c.l.b16 %v402
        %v499 = vunpack.c.l.b16 %v403
        %v500 = vunpack.c.l.b16 %v404
        %v501 = vunpack.c.l.b16 %v405
        %v502 = vunpack.c.l.b16 %v406
        %v503 = vunpack.c.l.b16 %v407
        %v504 = vpack.c.b16 %v457, %v456
        %v505 = vpack.c.b16 %v458, %v458
        %v506 = vpack.c.b16 %v460, %v459
        %v507 = vpack.c.b16 %v461, %v461
        %v508 = vpack.c.b16 %v463, %v462
        %v509 = vpack.c.b16 %v464, %v464
        %v510 = vpack.c.b16 %v466, %v465
        %v511 = vpack.c.b16 %v467, %v467
        %v512 = vpack.c.b16 %v469, %v468
        %v513 = vpack.c.b16 %v470, %v470
        %v514 = vpack.c.b16 %v472, %v471
        %v515 = vpack.c.b16 %v473, %v473
        %v516 = vpack.c.b16 %v475, %v474
        %v517 = vpack.c.b16 %v476, %v476
        %v518 = vpack.c.b16 %v478, %v477
        %v519 = vpack.c.b16 %v479, %v479
        %v520 = vpack.c.b16 %v481, %v480
        %v521 = vpack.c.b16 %v482, %v482
        %v522 = vpack.c.b16 %v484, %v483
        %v523 = vpack.c.b16 %v485, %v485
        %v524 = vpack.c.b16 %v487, %v486
        %v525 = vpack.c.b16 %v488, %v488
        %v526 = vpack.c.b16 %v490, %v489
        %v527 = vpack.c.b16 %v491, %v491
        %v528 = vpack.c.b16 %v493, %v492
        %v529 = vpack.c.b16 %v494, %v494
        %v530 = vpack.c.b16 %v496, %v495
        %v531 = vpack.c.b16 %v497, %v497
        %v532 = vpack.c.b16 %v499, %v498
        %v533 = vpack.c.b16 %v500, %v500
        %v534 = vpack.c.b16 %v502, %v501
        %v535 = vpack.c.b16 %v503, %v503
        %vm536 = vsmask.f32 7424
        %v538 = vshrl.u32 %v504, 16
        %v540 = vshll.u32 %v504, 16
        %v542 = vrot.slane %v540, 1
        %v543 = vor.u32 %v538, %v542
        %v545 = vshll.u32 %v505, 16
        %v547 = vrot.slane %v545, 1
        %v548 = vsel %vm536, %v543, %v547
        %v550 = vshrl.u32 %v506, 16
        %v552 = vshll.u32 %v506, 16
        %v554 = vrot.slane %v552, 1
        %v555 = vor.u32 %v550, %v554
        %v557 = vshll.u32 %v507, 16
        %v559 = vrot.slane %v557, 1
        %v560 = vsel %vm536, %v555, %v559
        %v562 = vshrl.u32 %v508, 16
        %v564 = vshll.u32 %v508, 16
        %v566 = vrot.slane %v564, 1
        %v567 = vor.u32 %v562, %v566
        %v569 = vshll.u32 %v509, 16
        %v571 = vrot.slane %v569, 1
        %v572 = vsel %vm536, %v567, %v571
        %v574 = vshrl.u32 %v510, 16
        %v576 = vshll.u32 %v510, 16
        %v578 = vrot.slane %v576, 1
        %v579 = vor.u32 %v574, %v578
        %v581 = vshll.u32 %v511, 16
        %v583 = vrot.slane %v581, 1
        %v584 = vsel %vm536, %v579, %v583
        %v586 = vshrl.u32 %v512, 16
        %v588 = vshll.u32 %v512, 16
        %v590 = vrot.slane %v588, 1
        %v591 = vor.u32 %v586, %v590
        %v593 = vshll.u32 %v513, 16
        %v595 = vrot.slane %v593, 1
        %v596 = vsel %vm536, %v591, %v595
        %v598 = vshrl.u32 %v514, 16
        %v600 = vshll.u32 %v514, 16
        %v602 = vrot.slane %v600, 1
        %v603 = vor.u32 %v598, %v602
        %v605 = vshll.u32 %v515, 16
        %v607 = vrot.slane %v605, 1
        %v608 = vsel %vm536, %v603, %v607
        %v610 = vshrl.u32 %v516, 16
        %v612 = vshll.u32 %v516, 16
        %v614 = vrot.slane %v612, 1
        %v615 = vor.u32 %v610, %v614
        %v617 = vshll.u32 %v517, 16
        %v619 = vrot.slane %v617, 1
        %v620 = vsel %vm536, %v615, %v619
        %v622 = vshrl.u32 %v518, 16
        %v624 = vshll.u32 %v518, 16
        %v626 = vrot.slane %v624, 1
        %v627 = vor.u32 %v622, %v626
        %v629 = vshll.u32 %v519, 16
        %v631 = vrot.slane %v629, 1
        %v632 = vsel %vm536, %v627, %v631
        %v634 = vshrl.u32 %v520, 16
        %v636 = vshll.u32 %v520, 16
        %v638 = vrot.slane %v636, 1
        %v639 = vor.u32 %v634, %v638
        %v641 = vshll.u32 %v521, 16
        %v643 = vrot.slane %v641, 1
        %v644 = vsel %vm536, %v639, %v643
        %v646 = vshrl.u32 %v522, 16
        %v648 = vshll.u32 %v522, 16
        %v650 = vrot.slane %v648, 1
        %v651 = vor.u32 %v646, %v650
        %v653 = vshll.u32 %v523, 16
        %v655 = vrot.slane %v653, 1
        %v656 = vsel %vm536, %v651, %v655
        %v658 = vshrl.u32 %v524, 16
        %v660 = vshll.u32 %v524, 16
        %v662 = vrot.slane %v660, 1
        %v663 = vor.u32 %v658, %v662
        %v665 = vshll.u32 %v525, 16
        %v667 = vrot.slane %v665, 1
        %v668 = vsel %vm536, %v663, %v667
        %v670 = vshrl.u32 %v526, 16
        %v672 = vshll.u32 %v526, 16
        %v674 = vrot.slane %v672, 1
        %v675 = vor.u32 %v670, %v674
        %v677 = vshll.u32 %v527, 16
        %v679 = vrot.slane %v677, 1
        %v680 = vsel %vm536, %v675, %v679
        %v682 = vshrl.u32 %v528, 16
        %v684 = vshll.u32 %v528, 16
        %v686 = vrot.slane %v684, 1
        %v687 = vor.u32 %v682, %v686
        %v689 = vshll.u32 %v529, 16
        %v691 = vrot.slane %v689, 1
        %v692 = vsel %vm536, %v687, %v691
        %v694 = vshrl.u32 %v530, 16
        %v696 = vshll.u32 %v530, 16
        %v698 = vrot.slane %v696, 1
        %v699 = vor.u32 %v694, %v698
        %v701 = vshll.u32 %v531, 16
        %v703 = vrot.slane %v701, 1
        %v704 = vsel %vm536, %v699, %v703
        %v706 = vshrl.u32 %v532, 16
        %v708 = vshll.u32 %v532, 16
        %v710 = vrot.slane %v708, 1
        %v711 = vor.u32 %v706, %v710
        %v713 = vshll.u32 %v533, 16
        %v715 = vrot.slane %v713, 1
        %v716 = vsel %vm536, %v711, %v715
        %v718 = vshrl.u32 %v534, 16
        %v720 = vshll.u32 %v534, 16
        %v722 = vrot.slane %v720, 1
        %v723 = vor.u32 %v718, %v722
        %v725 = vshll.u32 %v535, 16
        %v727 = vrot.slane %v725, 1
        %v728 = vsel %vm536, %v723, %v727
        %729 = vrot.lane.b32.xlu0 %v548, 4
        %v730 = vpop.permute.xlu0 %729
        %731 = vrot.lane.b32.xlu0 %v560, 4
        %v732 = vpop.permute.xlu0 %731
        %733 = vrot.lane.b32.xlu0 %v572, 4
        %v734 = vpop.permute.xlu0 %733
        %735 = vrot.lane.b32.xlu0 %v584, 4
        %v736 = vpop.permute.xlu0 %735
        %737 = vrot.lane.b32.xlu0 %v596, 4
        %v738 = vpop.permute.xlu0 %737
        %739 = vrot.lane.b32.xlu0 %v608, 4
        %v740 = vpop.permute.xlu0 %739
        %741 = vrot.lane.b32.xlu0 %v620, 4
        %v742 = vpop.permute.xlu0 %741
        %743 = vrot.lane.b32.xlu0 %v632, 4
        %v744 = vpop.permute.xlu0 %743
        %745 = vrot.lane.b32.xlu0 %v644, 4
        %v746 = vpop.permute.xlu0 %745
        %747 = vrot.lane.b32.xlu0 %v656, 4
        %v748 = vpop.permute.xlu0 %747
        %749 = vrot.lane.b32.xlu0 %v668, 4
        %v750 = vpop.permute.xlu0 %749
        %751 = vrot.lane.b32.xlu0 %v680, 4
        %v752 = vpop.permute.xlu0 %751
        %753 = vrot.lane.b32.xlu0 %v692, 4
        %v754 = vpop.permute.xlu0 %753
        %755 = vrot.lane.b32.xlu0 %v704, 4
        %v756 = vpop.permute.xlu0 %755
        %757 = vrot.lane.b32.xlu0 %v716, 4
        %v758 = vpop.permute.xlu0 %757
        %759 = vrot.lane.b32.xlu0 %v728, 4
        %v760 = vpop.permute.xlu0 %759
        %vm777 = vcmask 64544
        %778 = vst.msk [vmem:[#allocation2] sm:$0xff] %vm777, %v730
        %779 = vst.msk [vmem:[#allocation2 + $0x8] sm:$0xff] %vm777, %v732
        %780 = vst.msk [vmem:[#allocation2 + $0x10] sm:$0xff] %vm777, %v734
        %781 = vst.msk [vmem:[#allocation2 + $0x18] sm:$0xff] %vm777, %v736
        %782 = vst.msk [vmem:[#allocation2 + $0x20] sm:$0xff] %vm777, %v738
        %783 = vst.msk [vmem:[#allocation2 + $0x28] sm:$0xff] %vm777, %v740
        %784 = vst.msk [vmem:[#allocation2 + $0x30] sm:$0xff] %vm777, %v742
        %785 = vst.msk [vmem:[#allocation2 + $0x38] sm:$0xff] %vm777, %v744
        %786 = vst.msk [vmem:[#allocation2 + $0x40] sm:$0xff] %vm777, %v746
        %787 = vst.msk [vmem:[#allocation2 + $0x48] sm:$0xff] %vm777, %v748
        %788 = vst.msk [vmem:[#allocation2 + $0x50] sm:$0xff] %vm777, %v750
        %789 = vst.msk [vmem:[#allocation2 + $0x58] sm:$0xff] %vm777, %v752
        %790 = vst.msk [vmem:[#allocation2 + $0x60] sm:$0xff] %vm777, %v754
        %791 = vst.msk [vmem:[#allocation2 + $0x68] sm:$0xff] %vm777, %v756
        %792 = vst.msk [vmem:[#allocation2 + $0x70] sm:$0xff] %vm777, %v758
        %793 = vst.msk [vmem:[#allocation2 + $0x78] sm:$0xff] %vm777, %v760
        %v794 = vld [vmem:[%s206] sm:$0xe]
        %v795 = vld [vmem:[%s206 + $0x4] sm:$0xf]
        %v796 = vld [vmem:[%s206 + $0x8] sm:$0x1]
        %v797 = vld [vmem:[%s206 + $0xc] sm:$0xe]
        %v798 = vld [vmem:[%s206 + $0x10] sm:$0xf]
        %v799 = vld [vmem:[%s206 + $0x14] sm:$0x1]
        %v800 = vld [vmem:[%s206 + $0x18] sm:$0xe]
        %v801 = vld [vmem:[%s206 + $0x1c] sm:$0xf]
        %v802 = vld [vmem:[%s206 + $0x20] sm:$0x1]
        %v803 = vld [vmem:[%s206 + $0x24] sm:$0xe]
        %v804 = vld [vmem:[%s206 + $0x28] sm:$0xf]
        %v805 = vld [vmem:[%s206 + $0x2c] sm:$0x1]
        %v806 = vld [vmem:[%s206 + $0x30] sm:$0xe]
        %v807 = vld [vmem:[%s206 + $0x34] sm:$0xf]
        %v808 = vld [vmem:[%s206 + $0x38] sm:$0x1]
        %v809 = vld [vmem:[%s206 + $0x3c] sm:$0xe]
        %v810 = vld [vmem:[%s206 + $0x40] sm:$0xf]
        %v811 = vld [vmem:[%s206 + $0x44] sm:$0x1]
        %v812 = vld [vmem:[%s206 + $0x48] sm:$0xe]
        %v813 = vld [vmem:[%s206 + $0x4c] sm:$0xf]
        %v814 = vld [vmem:[%s206 + $0x50] sm:$0x1]
        %v815 = vld [vmem:[%s206 + $0x54] sm:$0xe]
        %v816 = vld [vmem:[%s206 + $0x58] sm:$0xf]
        %v817 = vld [vmem:[%s206 + $0x5c] sm:$0x1]
        %v818 = vld [vmem:[%s206 + $0x60] sm:$0xe]
        %v819 = vld [vmem:[%s206 + $0x64] sm:$0xf]
        %v820 = vld [vmem:[%s206 + $0x68] sm:$0x1]
        %v821 = vld [vmem:[%s206 + $0x6c] sm:$0xe]
        %v822 = vld [vmem:[%s206 + $0x70] sm:$0xf]
        %v823 = vld [vmem:[%s206 + $0x74] sm:$0x1]
        %v824 = vld [vmem:[%s206 + $0x78] sm:$0xe]
        %v825 = vld [vmem:[%s206 + $0x7c] sm:$0xf]
        %v826 = vld [vmem:[%s206 + $0x80] sm:$0x1]
        %v827 = vld [vmem:[%s206 + $0x84] sm:$0xe]
        %v828 = vld [vmem:[%s206 + $0x88] sm:$0xf]
        %v829 = vld [vmem:[%s206 + $0x8c] sm:$0x1]
        %v830 = vld [vmem:[%s206 + $0x90] sm:$0xe]
        %v831 = vld [vmem:[%s206 + $0x94] sm:$0xf]
        %v832 = vld [vmem:[%s206 + $0x98] sm:$0x1]
        %v833 = vld [vmem:[%s206 + $0x9c] sm:$0xe]
        %v834 = vld [vmem:[%s206 + $0xa0] sm:$0xf]
        %v835 = vld [vmem:[%s206 + $0xa4] sm:$0x1]
        %v836 = vld [vmem:[%s206 + $0xa8] sm:$0xe]
        %v837 = vld [vmem:[%s206 + $0xac] sm:$0xf]
        %v838 = vld [vmem:[%s206 + $0xb0] sm:$0x1]
        %v839 = vld [vmem:[%s206 + $0xb4] sm:$0xe]
        %v840 = vld [vmem:[%s206 + $0xb8] sm:$0xf]
        %v841 = vld [vmem:[%s206 + $0xbc] sm:$0x1]
        %v890 = vunpack.c.l.b16 %v794
        %v891 = vunpack.c.l.b16 %v795
        %v892 = vunpack.c.l.b16 %v796
        %v893 = vunpack.c.l.b16 %v797
        %v894 = vunpack.c.l.b16 %v798
        %v895 = vunpack.c.l.b16 %v799
        %v896 = vunpack.c.l.b16 %v800
        %v897 = vunpack.c.l.b16 %v801
        %v898 = vunpack.c.l.b16 %v802
        %v899 = vunpack.c.l.b16 %v803
        %v900 = vunpack.c.l.b16 %v804
        %v901 = vunpack.c.l.b16 %v805
        %v902 = vunpack.c.l.b16 %v806
        %v903 = vunpack.c.l.b16 %v807
        %v904 = vunpack.c.l.b16 %v808
        %v905 = vunpack.c.l.b16 %v809
        %v906 = vunpack.c.l.b16 %v810
        %v907 = vunpack.c.l.b16 %v811
        %v908 = vunpack.c.l.b16 %v812
        %v909 = vunpack.c.l.b16 %v813
        %v910 = vunpack.c.l.b16 %v814
        %v911 = vunpack.c.l.b16 %v815
        %v912 = vunpack.c.l.b16 %v816
        %v913 = vunpack.c.l.b16 %v817
        %v914 = vunpack.c.l.b16 %v818
        %v915 = vunpack.c.l.b16 %v819
        %v916 = vunpack.c.l.b16 %v820
        %v917 = vunpack.c.l.b16 %v821
        %v918 = vunpack.c.l.b16 %v822
        %v919 = vunpack.c.l.b16 %v823
        %v920 = vunpack.c.l.b16 %v824
        %v921 = vunpack.c.l.b16 %v825
        %v922 = vunpack.c.l.b16 %v826
        %v923 = vunpack.c.l.b16 %v827
        %v924 = vunpack.c.l.b16 %v828
        %v925 = vunpack.c.l.b16 %v829
        %v926 = vunpack.c.l.b16 %v830
        %v927 = vunpack.c.l.b16 %v831
        %v928 = vunpack.c.l.b16 %v832
        %v929 = vunpack.c.l.b16 %v833
        %v930 = vunpack.c.l.b16 %v834
        %v931 = vunpack.c.l.b16 %v835
        %v932 = vunpack.c.l.b16 %v836
        %v933 = vunpack.c.l.b16 %v837
        %v934 = vunpack.c.l.b16 %v838
        %v935 = vunpack.c.l.b16 %v839
        %v936 = vunpack.c.l.b16 %v840
        %v937 = vunpack.c.l.b16 %v841
        %v938 = vpack.c.b16 %v891, %v890
        %v939 = vpack.c.b16 %v892, %v892
        %v940 = vpack.c.b16 %v894, %v893
        %v941 = vpack.c.b16 %v895, %v895
        %v942 = vpack.c.b16 %v897, %v896
        %v943 = vpack.c.b16 %v898, %v898
        %v944 = vpack.c.b16 %v900, %v899
        %v945 = vpack.c.b16 %v901, %v901
        %v946 = vpack.c.b16 %v903, %v902
        %v947 = vpack.c.b16 %v904, %v904
        %v948 = vpack.c.b16 %v906, %v905
        %v949 = vpack.c.b16 %v907, %v907
        %v950 = vpack.c.b16 %v909, %v908
        %v951 = vpack.c.b16 %v910, %v910
        %v952 = vpack.c.b16 %v912, %v911
        %v953 = vpack.c.b16 %v913, %v913
        %v954 = vpack.c.b16 %v915, %v914
        %v955 = vpack.c.b16 %v916, %v916
        %v956 = vpack.c.b16 %v918, %v917
        %v957 = vpack.c.b16 %v919, %v919
        %v958 = vpack.c.b16 %v921, %v920
        %v959 = vpack.c.b16 %v922, %v922
        %v960 = vpack.c.b16 %v924, %v923
        %v961 = vpack.c.b16 %v925, %v925
        %v962 = vpack.c.b16 %v927, %v926
        %v963 = vpack.c.b16 %v928, %v928
        %v964 = vpack.c.b16 %v930, %v929
        %v965 = vpack.c.b16 %v931, %v931
        %v966 = vpack.c.b16 %v933, %v932
        %v967 = vpack.c.b16 %v934, %v934
        %v968 = vpack.c.b16 %v936, %v935
        %v969 = vpack.c.b16 %v937, %v937
        %vm970 = vcmask 1046528
        %v971 = vrot.slane %v938, 1
        %v972 = vrot.slane %v939, 1
        %v973 = vsel %vm970, %v971, %v972
        %v974 = vrot.slane %v940, 1
        %v975 = vrot.slane %v941, 1
        %v976 = vsel %vm970, %v974, %v975
        %v977 = vrot.slane %v942, 1
        %v978 = vrot.slane %v943, 1
        %v979 = vsel %vm970, %v977, %v978
        %v980 = vrot.slane %v944, 1
        %v981 = vrot.slane %v945, 1
        %v982 = vsel %vm970, %v980, %v981
        %v983 = vrot.slane %v946, 1
        %v984 = vrot.slane %v947, 1
        %v985 = vsel %vm970, %v983, %v984
        %v986 = vrot.slane %v948, 1
        %v987 = vrot.slane %v949, 1
        %v988 = vsel %vm970, %v986, %v987
        %v989 = vrot.slane %v950, 1
        %v990 = vrot.slane %v951, 1
        %v991 = vsel %vm970, %v989, %v990
        %v992 = vrot.slane %v952, 1
        %v993 = vrot.slane %v953, 1
        %v994 = vsel %vm970, %v992, %v993
        %v995 = vrot.slane %v954, 1
        %v996 = vrot.slane %v955, 1
        %v997 = vsel %vm970, %v995, %v996
        %v998 = vrot.slane %v956, 1
        %v999 = vrot.slane %v957, 1
        %v1000 = vsel %vm970, %v998, %v999
        %v1001 = vrot.slane %v958, 1
        %v1002 = vrot.slane %v959, 1
        %v1003 = vsel %vm970, %v1001, %v1002
        %v1004 = vrot.slane %v960, 1
        %v1005 = vrot.slane %v961, 1
        %v1006 = vsel %vm970, %v1004, %v1005
        %v1007 = vrot.slane %v962, 1
        %v1008 = vrot.slane %v963, 1
        %v1009 = vsel %vm970, %v1007, %v1008
        %v1010 = vrot.slane %v964, 1
        %v1011 = vrot.slane %v965, 1
        %v1012 = vsel %vm970, %v1010, %v1011
        %v1013 = vrot.slane %v966, 1
        %v1014 = vrot.slane %v967, 1
        %v1015 = vsel %vm970, %v1013, %v1014
        %v1016 = vrot.slane %v968, 1
        %v1017 = vrot.slane %v969, 1
        %v1018 = vsel %vm970, %v1016, %v1017
        %1019 = vrot.lane.b32.xlu0 %v973, 8
        %v1020 = vpop.permute.xlu0 %1019
        %1021 = vrot.lane.b32.xlu0 %v976, 8
        %v1022 = vpop.permute.xlu0 %1021
        %1023 = vrot.lane.b32.xlu0 %v979, 8
        %v1024 = vpop.permute.xlu0 %1023
        %1025 = vrot.lane.b32.xlu0 %v982, 8
        %v1026 = vpop.permute.xlu0 %1025
        %1027 = vrot.lane.b32.xlu0 %v985, 8
        %v1028 = vpop.permute.xlu0 %1027
        %1029 = vrot.lane.b32.xlu0 %v988, 8
        %v1030 = vpop.permute.xlu0 %1029
        %1031 = vrot.lane.b32.xlu0 %v991, 8
        %v1032 = vpop.permute.xlu0 %1031
        %1033 = vrot.lane.b32.xlu0 %v994, 8
        %v1034 = vpop.permute.xlu0 %1033
        %1035 = vrot.lane.b32.xlu0 %v997, 8
        %v1036 = vpop.permute.xlu0 %1035
        %1037 = vrot.lane.b32.xlu0 %v1000, 8
        %v1038 = vpop.permute.xlu0 %1037
        %1039 = vrot.lane.b32.xlu0 %v1003, 8
        %v1040 = vpop.permute.xlu0 %1039
        %1041 = vrot.lane.b32.xlu0 %v1006, 8
        %v1042 = vpop.permute.xlu0 %1041
        %1043 = vrot.lane.b32.xlu0 %v1009, 8
        %v1044 = vpop.permute.xlu0 %1043
        %1045 = vrot.lane.b32.xlu0 %v1012, 8
        %v1046 = vpop.permute.xlu0 %1045
        %1047 = vrot.lane.b32.xlu0 %v1015, 8
        %v1048 = vpop.permute.xlu0 %1047
        %1049 = vrot.lane.b32.xlu0 %v1018, 8
        %v1050 = vpop.permute.xlu0 %1049
        %vm1067 = vcmask 97344
        %1068 = vst.msk [vmem:[#allocation2] sm:$0xff] %vm1067, %v1020
        %1069 = vst.msk [vmem:[#allocation2 + $0x8] sm:$0xff] %vm1067, %v1022
        %1070 = vst.msk [vmem:[#allocation2 + $0x10] sm:$0xff] %vm1067, %v1024
        %1071 = vst.msk [vmem:[#allocation2 + $0x18] sm:$0xff] %vm1067, %v1026
        %1072 = vst.msk [vmem:[#allocation2 + $0x20] sm:$0xff] %vm1067, %v1028
        %1073 = vst.msk [vmem:[#allocation2 + $0x28] sm:$0xff] %vm1067, %v1030
        %1074 = vst.msk [vmem:[#allocation2 + $0x30] sm:$0xff] %vm1067, %v1032
        %1075 = vst.msk [vmem:[#allocation2 + $0x38] sm:$0xff] %vm1067, %v1034
        %1076 = vst.msk [vmem:[#allocation2 + $0x40] sm:$0xff] %vm1067, %v1036
        %1077 = vst.msk [vmem:[#allocation2 + $0x48] sm:$0xff] %vm1067, %v1038
        %1078 = vst.msk [vmem:[#allocation2 + $0x50] sm:$0xff] %vm1067, %v1040
        %1079 = vst.msk [vmem:[#allocation2 + $0x58] sm:$0xff] %vm1067, %v1042
        %1080 = vst.msk [vmem:[#allocation2 + $0x60] sm:$0xff] %vm1067, %v1044
        %1081 = vst.msk [vmem:[#allocation2 + $0x68] sm:$0xff] %vm1067, %v1046
        %1082 = vst.msk [vmem:[#allocation2 + $0x70] sm:$0xff] %vm1067, %v1048
        %1083 = vst.msk [vmem:[#allocation2 + $0x78] sm:$0xff] %vm1067, %v1050
        %s1084 = scalar_lea.vmem %s206, 12
        %v1085 = vld [vmem:[%s1084] sm:$0xf]
        %v1086 = vld [vmem:[%s1084 + $0x4] sm:$0xf]
        %v1087 = vld [vmem:[%s1084 + $0xc] sm:$0xf]
        %v1088 = vld [vmem:[%s1084 + $0x10] sm:$0xf]
        %v1089 = vld [vmem:[%s1084 + $0x18] sm:$0xf]
        %v1090 = vld [vmem:[%s1084 + $0x1c] sm:$0xf]
        %v1091 = vld [vmem:[%s1084 + $0x24] sm:$0xf]
        %v1092 = vld [vmem:[%s1084 + $0x28] sm:$0xf]
        %v1093 = vld [vmem:[%s1084 + $0x30] sm:$0xf]
        %v1094 = vld [vmem:[%s1084 + $0x34] sm:$0xf]
        %v1095 = vld [vmem:[%s1084 + $0x3c] sm:$0xf]
        %v1096 = vld [vmem:[%s1084 + $0x40] sm:$0xf]
        %v1097 = vld [vmem:[%s1084 + $0x48] sm:$0xf]
        %v1098 = vld [vmem:[%s1084 + $0x4c] sm:$0xf]
        %v1099 = vld [vmem:[%s1084 + $0x54] sm:$0xf]
        %v1100 = vld [vmem:[%s1084 + $0x58] sm:$0xf]
        %v1101 = vld [vmem:[%s1084 + $0x60] sm:$0xf]
        %v1102 = vld [vmem:[%s1084 + $0x64] sm:$0xf]
        %v1103 = vld [vmem:[%s1084 + $0x6c] sm:$0xf]
        %v1104 = vld [vmem:[%s1084 + $0x70] sm:$0xf]
        %v1105 = vld [vmem:[%s1084 + $0x78] sm:$0xf]
        %v1106 = vld [vmem:[%s1084 + $0x7c] sm:$0xf]
        %v1107 = vld [vmem:[%s1084 + $0x84] sm:$0xf]
        %v1108 = vld [vmem:[%s1084 + $0x88] sm:$0xf]
        %v1109 = vld [vmem:[%s1084 + $0x90] sm:$0xf]
        %v1110 = vld [vmem:[%s1084 + $0x94] sm:$0xf]
        %v1111 = vld [vmem:[%s1084 + $0x9c] sm:$0xf]
        %v1112 = vld [vmem:[%s1084 + $0xa0] sm:$0xf]
        %v1113 = vld [vmem:[%s1084 + $0xa8] sm:$0xf]
        %v1114 = vld [vmem:[%s1084 + $0xac] sm:$0xf]
        %v1115 = vld [vmem:[%s1084 + $0xb4] sm:$0xf]
        %v1116 = vld [vmem:[%s1084 + $0xb8] sm:$0xf]
        %v1149 = vunpack.c.l.b16 %v1085
        %v1150 = vunpack.c.l.b16 %v1086
        %v1151 = vunpack.c.l.b16 %v1087
        %v1152 = vunpack.c.l.b16 %v1088
        %v1153 = vunpack.c.l.b16 %v1089
        %v1154 = vunpack.c.l.b16 %v1090
        %v1155 = vunpack.c.l.b16 %v1091
        %v1156 = vunpack.c.l.b16 %v1092
        %v1157 = vunpack.c.l.b16 %v1093
        %v1158 = vunpack.c.l.b16 %v1094
        %v1159 = vunpack.c.l.b16 %v1095
        %v1160 = vunpack.c.l.b16 %v1096
        %v1161 = vunpack.c.l.b16 %v1097
        %v1162 = vunpack.c.l.b16 %v1098
        %v1163 = vunpack.c.l.b16 %v1099
        %v1164 = vunpack.c.l.b16 %v1100
        %v1165 = vunpack.c.l.b16 %v1101
        %v1166 = vunpack.c.l.b16 %v1102
        %v1167 = vunpack.c.l.b16 %v1103
        %v1168 = vunpack.c.l.b16 %v1104
        %v1169 = vunpack.c.l.b16 %v1105
        %v1170 = vunpack.c.l.b16 %v1106
        %v1171 = vunpack.c.l.b16 %v1107
        %v1172 = vunpack.c.l.b16 %v1108
        %v1173 = vunpack.c.l.b16 %v1109
        %v1174 = vunpack.c.l.b16 %v1110
        %v1175 = vunpack.c.l.b16 %v1111
        %v1176 = vunpack.c.l.b16 %v1112
        %v1177 = vunpack.c.l.b16 %v1113
        %v1178 = vunpack.c.l.b16 %v1114
        %v1179 = vunpack.c.l.b16 %v1115
        %v1180 = vunpack.c.l.b16 %v1116
        %v1181 = vpack.c.b16 %v1150, %v1149
        %v1182 = vpack.c.b16 %v1152, %v1151
        %v1183 = vpack.c.b16 %v1154, %v1153
        %v1184 = vpack.c.b16 %v1156, %v1155
        %v1185 = vpack.c.b16 %v1158, %v1157
        %v1186 = vpack.c.b16 %v1160, %v1159
        %v1187 = vpack.c.b16 %v1162, %v1161
        %v1188 = vpack.c.b16 %v1164, %v1163
        %v1189 = vpack.c.b16 %v1166, %v1165
        %v1190 = vpack.c.b16 %v1168, %v1167
        %v1191 = vpack.c.b16 %v1170, %v1169
        %v1192 = vpack.c.b16 %v1172, %v1171
        %v1193 = vpack.c.b16 %v1174, %v1173
        %v1194 = vpack.c.b16 %v1176, %v1175
        %v1195 = vpack.c.b16 %v1178, %v1177
        %v1196 = vpack.c.b16 %v1180, %v1179
        %1197 = vrot.lane.b32.xlu0 %v1181, 12
        %v1198 = vpop.permute.xlu0 %1197
        %1199 = vrot.lane.b32.xlu0 %v1182, 12
        %v1200 = vpop.permute.xlu0 %1199
        %1201 = vrot.lane.b32.xlu0 %v1183, 12
        %v1202 = vpop.permute.xlu0 %1201
        %1203 = vrot.lane.b32.xlu0 %v1184, 12
        %v1204 = vpop.permute.xlu0 %1203
        %1205 = vrot.lane.b32.xlu0 %v1185, 12
        %v1206 = vpop.permute.xlu0 %1205
        %1207 = vrot.lane.b32.xlu0 %v1186, 12
        %v1208 = vpop.permute.xlu0 %1207
        %1209 = vrot.lane.b32.xlu0 %v1187, 12
        %v1210 = vpop.permute.xlu0 %1209
        %1211 = vrot.lane.b32.xlu0 %v1188, 12
        %v1212 = vpop.permute.xlu0 %1211
        %1213 = vrot.lane.b32.xlu0 %v1189, 12
        %v1214 = vpop.permute.xlu0 %1213
        %1215 = vrot.lane.b32.xlu0 %v1190, 12
        %v1216 = vpop.permute.xlu0 %1215
        %1217 = vrot.lane.b32.xlu0 %v1191, 12
        %v1218 = vpop.permute.xlu0 %1217
        %1219 = vrot.lane.b32.xlu0 %v1192, 12
        %v1220 = vpop.permute.xlu0 %1219
        %1221 = vrot.lane.b32.xlu0 %v1193, 12
        %v1222 = vpop.permute.xlu0 %1221
        %1223 = vrot.lane.b32.xlu0 %v1194, 12
        %v1224 = vpop.permute.xlu0 %1223
        %1225 = vrot.lane.b32.xlu0 %v1195, 12
        %v1226 = vpop.permute.xlu0 %1225
        %1227 = vrot.lane.b32.xlu0 %v1196, 12
        %v1228 = vpop.permute.xlu0 %1227
        %vm1245 = vcmask 130144
        %1246 = vst.msk [vmem:[#allocation2] sm:$0xff] %vm1245, %v1198
        %1247 = vst.msk [vmem:[#allocation2 + $0x8] sm:$0xff] %vm1245, %v1200
        %1248 = vst.msk [vmem:[#allocation2 + $0x10] sm:$0xff] %vm1245, %v1202
        %1249 = vst.msk [vmem:[#allocation2 + $0x18] sm:$0xff] %vm1245, %v1204
        %1250 = vst.msk [vmem:[#allocation2 + $0x20] sm:$0xff] %vm1245, %v1206
        %1251 = vst.msk [vmem:[#allocation2 + $0x28] sm:$0xff] %vm1245, %v1208
        %1252 = vst.msk [vmem:[#allocation2 + $0x30] sm:$0xff] %vm1245, %v1210
        %1253 = vst.msk [vmem:[#allocation2 + $0x38] sm:$0xff] %vm1245, %v1212
        %1254 = vst.msk [vmem:[#allocation2 + $0x40] sm:$0xff] %vm1245, %v1214
        %1255 = vst.msk [vmem:[#allocation2 + $0x48] sm:$0xff] %vm1245, %v1216
        %1256 = vst.msk [vmem:[#allocation2 + $0x50] sm:$0xff] %vm1245, %v1218
        %1257 = vst.msk [vmem:[#allocation2 + $0x58] sm:$0xff] %vm1245, %v1220
        %1258 = vst.msk [vmem:[#allocation2 + $0x60] sm:$0xff] %vm1245, %v1222
        %1259 = vst.msk [vmem:[#allocation2 + $0x68] sm:$0xff] %vm1245, %v1224
        %1260 = vst.msk [vmem:[#allocation2 + $0x70] sm:$0xff] %vm1245, %v1226
        %1261 = vst.msk [vmem:[#allocation2 + $0x78] sm:$0xff] %vm1245, %v1228
        %v1262 = vld [vmem:[%s1084] sm:$0xf]
        %v1263 = vld [vmem:[%s1084 + $0x4] sm:$0xf]
        %v1264 = vld [vmem:[%s1084 + $0x8] sm:$0x1]
        %v1265 = vld [vmem:[%s1084 + $0xc] sm:$0xf]
        %v1266 = vld [vmem:[%s1084 + $0x10] sm:$0xf]
        %v1267 = vld [vmem:[%s1084 + $0x14] sm:$0x1]
        %v1268 = vld [vmem:[%s1084 + $0x18] sm:$0xf]
        %v1269 = vld [vmem:[%s1084 + $0x1c] sm:$0xf]
        %v1270 = vld [vmem:[%s1084 + $0x20] sm:$0x1]
        %v1271 = vld [vmem:[%s1084 + $0x24] sm:$0xf]
        %v1272 = vld [vmem:[%s1084 + $0x28] sm:$0xf]
        %v1273 = vld [vmem:[%s1084 + $0x2c] sm:$0x1]
        %v1274 = vld [vmem:[%s1084 + $0x30] sm:$0xf]
        %v1275 = vld [vmem:[%s1084 + $0x34] sm:$0xf]
        %v1276 = vld [vmem:[%s1084 + $0x38] sm:$0x1]
        %v1277 = vld [vmem:[%s1084 + $0x3c] sm:$0xf]
        %v1278 = vld [vmem:[%s1084 + $0x40] sm:$0xf]
        %v1279 = vld [vmem:[%s1084 + $0x44] sm:$0x1]
        %v1280 = vld [vmem:[%s1084 + $0x48] sm:$0xf]
        %v1281 = vld [vmem:[%s1084 + $0x4c] sm:$0xf]
        %v1282 = vld [vmem:[%s1084 + $0x50] sm:$0x1]
        %v1283 = vld [vmem:[%s1084 + $0x54] sm:$0xf]
        %v1284 = vld [vmem:[%s1084 + $0x58] sm:$0xf]
        %v1285 = vld [vmem:[%s1084 + $0x5c] sm:$0x1]
        %v1286 = vld [vmem:[%s1084 + $0x60] sm:$0xf]
        %v1287 = vld [vmem:[%s1084 + $0x64] sm:$0xf]
        %v1288 = vld [vmem:[%s1084 + $0x68] sm:$0x1]
        %v1289 = vld [vmem:[%s1084 + $0x6c] sm:$0xf]
        %v1290 = vld [vmem:[%s1084 + $0x70] sm:$0xf]
        %v1291 = vld [vmem:[%s1084 + $0x74] sm:$0x1]
        %v1292 = vld [vmem:[%s1084 + $0x78] sm:$0xf]
        %v1293 = vld [vmem:[%s1084 + $0x7c] sm:$0xf]
        %v1294 = vld [vmem:[%s1084 + $0x80] sm:$0x1]
        %v1295 = vld [vmem:[%s1084 + $0x84] sm:$0xf]
        %v1296 = vld [vmem:[%s1084 + $0x88] sm:$0xf]
        %v1297 = vld [vmem:[%s1084 + $0x8c] sm:$0x1]
        %v1298 = vld [vmem:[%s1084 + $0x90] sm:$0xf]
        %v1299 = vld [vmem:[%s1084 + $0x94] sm:$0xf]
        %v1300 = vld [vmem:[%s1084 + $0x98] sm:$0x1]
        %v1301 = vld [vmem:[%s1084 + $0x9c] sm:$0xf]
        %v1302 = vld [vmem:[%s1084 + $0xa0] sm:$0xf]
        %v1303 = vld [vmem:[%s1084 + $0xa4] sm:$0x1]
        %v1304 = vld [vmem:[%s1084 + $0xa8] sm:$0xf]
        %v1305 = vld [vmem:[%s1084 + $0xac] sm:$0xf]
        %v1306 = vld [vmem:[%s1084 + $0xb0] sm:$0x1]
        %v1307 = vld [vmem:[%s1084 + $0xb4] sm:$0xf]
        %v1308 = vld [vmem:[%s1084 + $0xb8] sm:$0xf]
        %v1309 = vld [vmem:[%s1084 + $0xbc] sm:$0x1]
        %v1358 = vunpack.c.l.b16 %v1262
        %v1359 = vunpack.c.l.b16 %v1263
        %v1360 = vunpack.c.l.b16 %v1264
        %v1361 = vunpack.c.l.b16 %v1265
        %v1362 = vunpack.c.l.b16 %v1266
        %v1363 = vunpack.c.l.b16 %v1267
        %v1364 = vunpack.c.l.b16 %v1268
        %v1365 = vunpack.c.l.b16 %v1269
        %v1366 = vunpack.c.l.b16 %v1270
        %v1367 = vunpack.c.l.b16 %v1271
        %v1368 = vunpack.c.l.b16 %v1272
        %v1369 = vunpack.c.l.b16 %v1273
        %v1370 = vunpack.c.l.b16 %v1274
        %v1371 = vunpack.c.l.b16 %v1275
        %v1372 = vunpack.c.l.b16 %v1276
        %v1373 = vunpack.c.l.b16 %v1277
        %v1374 = vunpack.c.l.b16 %v1278
        %v1375 = vunpack.c.l.b16 %v1279
        %v1376 = vunpack.c.l.b16 %v1280
        %v1377 = vunpack.c.l.b16 %v1281
        %v1378 = vunpack.c.l.b16 %v1282
        %v1379 = vunpack.c.l.b16 %v1283
        %v1380 = vunpack.c.l.b16 %v1284
        %v1381 = vunpack.c.l.b16 %v1285
        %v1382 = vunpack.c.l.b16 %v1286
        %v1383 = vunpack.c.l.b16 %v1287
        %v1384 = vunpack.c.l.b16 %v1288
        %v1385 = vunpack.c.l.b16 %v1289
        %v1386 = vunpack.c.l.b16 %v1290
        %v1387 = vunpack.c.l.b16 %v1291
        %v1388 = vunpack.c.l.b16 %v1292
        %v1389 = vunpack.c.l.b16 %v1293
        %v1390 = vunpack.c.l.b16 %v1294
        %v1391 = vunpack.c.l.b16 %v1295
        %v1392 = vunpack.c.l.b16 %v1296
        %v1393 = vunpack.c.l.b16 %v1297
        %v1394 = vunpack.c.l.b16 %v1298
        %v1395 = vunpack.c.l.b16 %v1299
        %v1396 = vunpack.c.l.b16 %v1300
        %v1397 = vunpack.c.l.b16 %v1301
        %v1398 = vunpack.c.l.b16 %v1302
        %v1399 = vunpack.c.l.b16 %v1303
        %v1400 = vunpack.c.l.b16 %v1304
        %v1401 = vunpack.c.l.b16 %v1305
        %v1402 = vunpack.c.l.b16 %v1306
        %v1403 = vunpack.c.l.b16 %v1307
        %v1404 = vunpack.c.l.b16 %v1308
        %v1405 = vunpack.c.l.b16 %v1309
        %v1406 = vpack.c.b16 %v1359, %v1358
        %v1407 = vpack.c.b16 %v1360, %v1360
        %v1408 = vpack.c.b16 %v1362, %v1361
        %v1409 = vpack.c.b16 %v1363, %v1363
        %v1410 = vpack.c.b16 %v1365, %v1364
        %v1411 = vpack.c.b16 %v1366, %v1366
        %v1412 = vpack.c.b16 %v1368, %v1367
        %v1413 = vpack.c.b16 %v1369, %v1369
        %v1414 = vpack.c.b16 %v1371, %v1370
        %v1415 = vpack.c.b16 %v1372, %v1372
        %v1416 = vpack.c.b16 %v1374, %v1373
        %v1417 = vpack.c.b16 %v1375, %v1375
        %v1418 = vpack.c.b16 %v1377, %v1376
        %v1419 = vpack.c.b16 %v1378, %v1378
        %v1420 = vpack.c.b16 %v1380, %v1379
        %v1421 = vpack.c.b16 %v1381, %v1381
        %v1422 = vpack.c.b16 %v1383, %v1382
        %v1423 = vpack.c.b16 %v1384, %v1384
        %v1424 = vpack.c.b16 %v1386, %v1385
        %v1425 = vpack.c.b16 %v1387, %v1387
        %v1426 = vpack.c.b16 %v1389, %v1388
        %v1427 = vpack.c.b16 %v1390, %v1390
        %v1428 = vpack.c.b16 %v1392, %v1391
        %v1429 = vpack.c.b16 %v1393, %v1393
        %v1430 = vpack.c.b16 %v1395, %v1394
        %v1431 = vpack.c.b16 %v1396, %v1396
        %v1432 = vpack.c.b16 %v1398, %v1397
        %v1433 = vpack.c.b16 %v1399, %v1399
        %v1434 = vpack.c.b16 %v1401, %v1400
        %v1435 = vpack.c.b16 %v1402, %v1402
        %v1436 = vpack.c.b16 %v1404, %v1403
        %v1437 = vpack.c.b16 %v1405, %v1405
        %v1439 = vshrl.u32 %v1406, 16
        %v1441 = vshll.u32 %v1406, 16
        %v1443 = vrot.slane %v1441, 1
        %v1444 = vor.u32 %v1439, %v1443
        %v1446 = vshll.u32 %v1407, 16
        %v1448 = vrot.slane %v1446, 1
        %v1449 = vsel %vm536, %v1444, %v1448
        %v1451 = vshrl.u32 %v1408, 16
        %v1453 = vshll.u32 %v1408, 16
        %v1455 = vrot.slane %v1453, 1
        %v1456 = vor.u32 %v1451, %v1455
        %v1458 = vshll.u32 %v1409, 16
        %v1460 = vrot.slane %v1458, 1
        %v1461 = vsel %vm536, %v1456, %v1460
        %v1463 = vshrl.u32 %v1410, 16
        %v1465 = vshll.u32 %v1410, 16
        %v1467 = vrot.slane %v1465, 1
        %v1468 = vor.u32 %v1463, %v1467
        %v1470 = vshll.u32 %v1411, 16
        %v1472 = vrot.slane %v1470, 1
        %v1473 = vsel %vm536, %v1468, %v1472
        %v1475 = vshrl.u32 %v1412, 16
        %v1477 = vshll.u32 %v1412, 16
        %v1479 = vrot.slane %v1477, 1
        %v1480 = vor.u32 %v1475, %v1479
        %v1482 = vshll.u32 %v1413, 16
        %v1484 = vrot.slane %v1482, 1
        %v1485 = vsel %vm536, %v1480, %v1484
        %v1487 = vshrl.u32 %v1414, 16
        %v1489 = vshll.u32 %v1414, 16
        %v1491 = vrot.slane %v1489, 1
        %v1492 = vor.u32 %v1487, %v1491
        %v1494 = vshll.u32 %v1415, 16
        %v1496 = vrot.slane %v1494, 1
        %v1497 = vsel %vm536, %v1492, %v1496
        %v1499 = vshrl.u32 %v1416, 16
        %v1501 = vshll.u32 %v1416, 16
        %v1503 = vrot.slane %v1501, 1
        %v1504 = vor.u32 %v1499, %v1503
        %v1506 = vshll.u32 %v1417, 16
        %v1508 = vrot.slane %v1506, 1
        %v1509 = vsel %vm536, %v1504, %v1508
        %v1511 = vshrl.u32 %v1418, 16
        %v1513 = vshll.u32 %v1418, 16
        %v1515 = vrot.slane %v1513, 1
        %v1516 = vor.u32 %v1511, %v1515
        %v1518 = vshll.u32 %v1419, 16
        %v1520 = vrot.slane %v1518, 1
        %v1521 = vsel %vm536, %v1516, %v1520
        %v1523 = vshrl.u32 %v1420, 16
        %v1525 = vshll.u32 %v1420, 16
        %v1527 = vrot.slane %v1525, 1
        %v1528 = vor.u32 %v1523, %v1527
        %v1530 = vshll.u32 %v1421, 16
        %v1532 = vrot.slane %v1530, 1
        %v1533 = vsel %vm536, %v1528, %v1532
        %v1535 = vshrl.u32 %v1422, 16
        %v1537 = vshll.u32 %v1422, 16
        %v1539 = vrot.slane %v1537, 1
        %v1540 = vor.u32 %v1535, %v1539
        %v1542 = vshll.u32 %v1423, 16
        %v1544 = vrot.slane %v1542, 1
        %v1545 = vsel %vm536, %v1540, %v1544
        %v1547 = vshrl.u32 %v1424, 16
        %v1549 = vshll.u32 %v1424, 16
        %v1551 = vrot.slane %v1549, 1
        %v1552 = vor.u32 %v1547, %v1551
        %v1554 = vshll.u32 %v1425, 16
        %v1556 = vrot.slane %v1554, 1
        %v1557 = vsel %vm536, %v1552, %v1556
        %v1559 = vshrl.u32 %v1426, 16
        %v1561 = vshll.u32 %v1426, 16
        %v1563 = vrot.slane %v1561, 1
        %v1564 = vor.u32 %v1559, %v1563
        %v1566 = vshll.u32 %v1427, 16
        %v1568 = vrot.slane %v1566, 1
        %v1569 = vsel %vm536, %v1564, %v1568
        %v1571 = vshrl.u32 %v1428, 16
        %v1573 = vshll.u32 %v1428, 16
        %v1575 = vrot.slane %v1573, 1
        %v1576 = vor.u32 %v1571, %v1575
        %v1578 = vshll.u32 %v1429, 16
        %v1580 = vrot.slane %v1578, 1
        %v1581 = vsel %vm536, %v1576, %v1580
        %v1583 = vshrl.u32 %v1430, 16
        %v1585 = vshll.u32 %v1430, 16
        %v1587 = vrot.slane %v1585, 1
        %v1588 = vor.u32 %v1583, %v1587
        %v1590 = vshll.u32 %v1431, 16
        %v1592 = vrot.slane %v1590, 1
        %v1593 = vsel %vm536, %v1588, %v1592
        %v1595 = vshrl.u32 %v1432, 16
        %v1597 = vshll.u32 %v1432, 16
        %v1599 = vrot.slane %v1597, 1
        %v1600 = vor.u32 %v1595, %v1599
        %v1602 = vshll.u32 %v1433, 16
        %v1604 = vrot.slane %v1602, 1
        %v1605 = vsel %vm536, %v1600, %v1604
        %v1607 = vshrl.u32 %v1434, 16
        %v1609 = vshll.u32 %v1434, 16
        %v1611 = vrot.slane %v1609, 1
        %v1612 = vor.u32 %v1607, %v1611
        %v1614 = vshll.u32 %v1435, 16
        %v1616 = vrot.slane %v1614, 1
        %v1617 = vsel %vm536, %v1612, %v1616
        %v1619 = vshrl.u32 %v1436, 16
        %v1621 = vshll.u32 %v1436, 16
        %v1623 = vrot.slane %v1621, 1
        %v1624 = vor.u32 %v1619, %v1623
        %v1626 = vshll.u32 %v1437, 16
        %v1628 = vrot.slane %v1626, 1
        %v1629 = vsel %vm536, %v1624, %v1628
        %1630 = vrot.lane.b32.xlu0 %v1449, 16
        %v1631 = vpop.permute.xlu0 %1630
        %1632 = vrot.lane.b32.xlu0 %v1461, 16
        %v1633 = vpop.permute.xlu0 %1632
        %1634 = vrot.lane.b32.xlu0 %v1473, 16
        %v1635 = vpop.permute.xlu0 %1634
        %1636 = vrot.lane.b32.xlu0 %v1485, 16
        %v1637 = vpop.permute.xlu0 %1636
        %1638 = vrot.lane.b32.xlu0 %v1497, 16
        %v1639 = vpop.permute.xlu0 %1638
        %1640 = vrot.lane.b32.xlu0 %v1509, 16
        %v1641 = vpop.permute.xlu0 %1640
        %1642 = vrot.lane.b32.xlu0 %v1521, 16
        %v1643 = vpop.permute.xlu0 %1642
        %1644 = vrot.lane.b32.xlu0 %v1533, 16
        %v1645 = vpop.permute.xlu0 %1644
        %1646 = vrot.lane.b32.xlu0 %v1545, 16
        %v1647 = vpop.permute.xlu0 %1646
        %1648 = vrot.lane.b32.xlu0 %v1557, 16
        %v1649 = vpop.permute.xlu0 %1648
        %1650 = vrot.lane.b32.xlu0 %v1569, 16
        %v1651 = vpop.permute.xlu0 %1650
        %1652 = vrot.lane.b32.xlu0 %v1581, 16
        %v1653 = vpop.permute.xlu0 %1652
        %1654 = vrot.lane.b32.xlu0 %v1593, 16
        %v1655 = vpop.permute.xlu0 %1654
        %1656 = vrot.lane.b32.xlu0 %v1605, 16
        %v1657 = vpop.permute.xlu0 %1656
        %1658 = vrot.lane.b32.xlu0 %v1617, 16
        %v1659 = vpop.permute.xlu0 %1658
        %1660 = vrot.lane.b32.xlu0 %v1629, 16
        %v1661 = vpop.permute.xlu0 %1660
        %vm1678 = vcmask 162944
        %1679 = vst.msk [vmem:[#allocation2] sm:$0xff] %vm1678, %v1631
        %1680 = vst.msk [vmem:[#allocation2 + $0x8] sm:$0xff] %vm1678, %v1633
        %1681 = vst.msk [vmem:[#allocation2 + $0x10] sm:$0xff] %vm1678, %v1635
        %1682 = vst.msk [vmem:[#allocation2 + $0x18] sm:$0xff] %vm1678, %v1637
        %1683 = vst.msk [vmem:[#allocation2 + $0x20] sm:$0xff] %vm1678, %v1639
        %1684 = vst.msk [vmem:[#allocation2 + $0x28] sm:$0xff] %vm1678, %v1641
        %1685 = vst.msk [vmem:[#allocation2 + $0x30] sm:$0xff] %vm1678, %v1643
        %1686 = vst.msk [vmem:[#allocation2 + $0x38] sm:$0xff] %vm1678, %v1645
        %1687 = vst.msk [vmem:[#allocation2 + $0x40] sm:$0xff] %vm1678, %v1647
        %1688 = vst.msk [vmem:[#allocation2 + $0x48] sm:$0xff] %vm1678, %v1649
        %1689 = vst.msk [vmem:[#allocation2 + $0x50] sm:$0xff] %vm1678, %v1651
        %1690 = vst.msk [vmem:[#allocation2 + $0x58] sm:$0xff] %vm1678, %v1653
        %1691 = vst.msk [vmem:[#allocation2 + $0x60] sm:$0xff] %vm1678, %v1655
        %1692 = vst.msk [vmem:[#allocation2 + $0x68] sm:$0xff] %vm1678, %v1657
        %1693 = vst.msk [vmem:[#allocation2 + $0x70] sm:$0xff] %vm1678, %v1659
        %1694 = vst.msk [vmem:[#allocation2 + $0x78] sm:$0xff] %vm1678, %v1661
        %v1695 = vld [vmem:[%s1084] sm:$0xe]
        %v1696 = vld [vmem:[%s1084 + $0x4] sm:$0xf]
        %v1697 = vld [vmem:[%s1084 + $0x8] sm:$0x1]
        %v1698 = vld [vmem:[%s1084 + $0xc] sm:$0xe]
        %v1699 = vld [vmem:[%s1084 + $0x10] sm:$0xf]
        %v1700 = vld [vmem:[%s1084 + $0x14] sm:$0x1]
        %v1701 = vld [vmem:[%s1084 + $0x18] sm:$0xe]
        %v1702 = vld [vmem:[%s1084 + $0x1c] sm:$0xf]
        %v1703 = vld [vmem:[%s1084 + $0x20] sm:$0x1]
        %v1704 = vld [vmem:[%s1084 + $0x24] sm:$0xe]
        %v1705 = vld [vmem:[%s1084 + $0x28] sm:$0xf]
        %v1706 = vld [vmem:[%s1084 + $0x2c] sm:$0x1]
        %v1707 = vld [vmem:[%s1084 + $0x30] sm:$0xe]
        %v1708 = vld [vmem:[%s1084 + $0x34] sm:$0xf]
        %v1709 = vld [vmem:[%s1084 + $0x38] sm:$0x1]
        %v1710 = vld [vmem:[%s1084 + $0x3c] sm:$0xe]
        %v1711 = vld [vmem:[%s1084 + $0x40] sm:$0xf]
        %v1712 = vld [vmem:[%s1084 + $0x44] sm:$0x1]
        %v1713 = vld [vmem:[%s1084 + $0x48] sm:$0xe]
        %v1714 = vld [vmem:[%s1084 + $0x4c] sm:$0xf]
        %v1715 = vld [vmem:[%s1084 + $0x50] sm:$0x1]
        %v1716 = vld [vmem:[%s1084 + $0x54] sm:$0xe]
        %v1717 = vld [vmem:[%s1084 + $0x58] sm:$0xf]
        %v1718 = vld [vmem:[%s1084 + $0x5c] sm:$0x1]
        %v1719 = vld [vmem:[%s1084 + $0x60] sm:$0xe]
        %v1720 = vld [vmem:[%s1084 + $0x64] sm:$0xf]
        %v1721 = vld [vmem:[%s1084 + $0x68] sm:$0x1]
        %v1722 = vld [vmem:[%s1084 + $0x6c] sm:$0xe]
        %v1723 = vld [vmem:[%s1084 + $0x70] sm:$0xf]
        %v1724 = vld [vmem:[%s1084 + $0x74] sm:$0x1]
        %v1725 = vld [vmem:[%s1084 + $0x78] sm:$0xe]
        %v1726 = vld [vmem:[%s1084 + $0x7c] sm:$0xf]
        %v1727 = vld [vmem:[%s1084 + $0x80] sm:$0x1]
        %v1728 = vld [vmem:[%s1084 + $0x84] sm:$0xe]
        %v1729 = vld [vmem:[%s1084 + $0x88] sm:$0xf]
        %v1730 = vld [vmem:[%s1084 + $0x8c] sm:$0x1]
        %v1731 = vld [vmem:[%s1084 + $0x90] sm:$0xe]
        %v1732 = vld [vmem:[%s1084 + $0x94] sm:$0xf]
        %v1733 = vld [vmem:[%s1084 + $0x98] sm:$0x1]
        %v1734 = vld [vmem:[%s1084 + $0x9c] sm:$0xe]
        %v1735 = vld [vmem:[%s1084 + $0xa0] sm:$0xf]
        %v1736 = vld [vmem:[%s1084 + $0xa4] sm:$0x1]
        %v1737 = vld [vmem:[%s1084 + $0xa8] sm:$0xe]
        %v1738 = vld [vmem:[%s1084 + $0xac] sm:$0xf]
        %v1739 = vld [vmem:[%s1084 + $0xb0] sm:$0x1]
        %v1740 = vld [vmem:[%s1084 + $0xb4] sm:$0xe]
        %v1741 = vld [vmem:[%s1084 + $0xb8] sm:$0xf]
        %v1742 = vld [vmem:[%s1084 + $0xbc] sm:$0x1]
        %v1791 = vunpack.c.l.b16 %v1695
        %v1792 = vunpack.c.l.b16 %v1696
        %v1793 = vunpack.c.l.b16 %v1697
        %v1794 = vunpack.c.l.b16 %v1698
        %v1795 = vunpack.c.l.b16 %v1699
        %v1796 = vunpack.c.l.b16 %v1700
        %v1797 = vunpack.c.l.b16 %v1701
        %v1798 = vunpack.c.l.b16 %v1702
        %v1799 = vunpack.c.l.b16 %v1703
        %v1800 = vunpack.c.l.b16 %v1704
        %v1801 = vunpack.c.l.b16 %v1705
        %v1802 = vunpack.c.l.b16 %v1706
        %v1803 = vunpack.c.l.b16 %v1707
        %v1804 = vunpack.c.l.b16 %v1708
        %v1805 = vunpack.c.l.b16 %v1709
        %v1806 = vunpack.c.l.b16 %v1710
        %v1807 = vunpack.c.l.b16 %v1711
        %v1808 = vunpack.c.l.b16 %v1712
        %v1809 = vunpack.c.l.b16 %v1713
        %v1810 = vunpack.c.l.b16 %v1714
        %v1811 = vunpack.c.l.b16 %v1715
        %v1812 = vunpack.c.l.b16 %v1716
        %v1813 = vunpack.c.l.b16 %v1717
        %v1814 = vunpack.c.l.b16 %v1718
        %v1815 = vunpack.c.l.b16 %v1719
        %v1816 = vunpack.c.l.b16 %v1720
        %v1817 = vunpack.c.l.b16 %v1721
        %v1818 = vunpack.c.l.b16 %v1722
        %v1819 = vunpack.c.l.b16 %v1723
        %v1820 = vunpack.c.l.b16 %v1724
        %v1821 = vunpack.c.l.b16 %v1725
        %v1822 = vunpack.c.l.b16 %v1726
        %v1823 = vunpack.c.l.b16 %v1727
        %v1824 = vunpack.c.l.b16 %v1728
        %v1825 = vunpack.c.l.b16 %v1729
        %v1826 = vunpack.c.l.b16 %v1730
        %v1827 = vunpack.c.l.b16 %v1731
        %v1828 = vunpack.c.l.b16 %v1732
        %v1829 = vunpack.c.l.b16 %v1733
        %v1830 = vunpack.c.l.b16 %v1734
        %v1831 = vunpack.c.l.b16 %v1735
        %v1832 = vunpack.c.l.b16 %v1736
        %v1833 = vunpack.c.l.b16 %v1737
        %v1834 = vunpack.c.l.b16 %v1738
        %v1835 = vunpack.c.l.b16 %v1739
        %v1836 = vunpack.c.l.b16 %v1740
        %v1837 = vunpack.c.l.b16 %v1741
        %v1838 = vunpack.c.l.b16 %v1742
        %v1839 = vpack.c.b16 %v1792, %v1791
        %v1840 = vpack.c.b16 %v1793, %v1793
        %v1841 = vpack.c.b16 %v1795, %v1794
        %v1842 = vpack.c.b16 %v1796, %v1796
        %v1843 = vpack.c.b16 %v1798, %v1797
        %v1844 = vpack.c.b16 %v1799, %v1799
        %v1845 = vpack.c.b16 %v1801, %v1800
        %v1846 = vpack.c.b16 %v1802, %v1802
        %v1847 = vpack.c.b16 %v1804, %v1803
        %v1848 = vpack.c.b16 %v1805, %v1805
        %v1849 = vpack.c.b16 %v1807, %v1806
        %v1850 = vpack.c.b16 %v1808, %v1808
        %v1851 = vpack.c.b16 %v1810, %v1809
        %v1852 = vpack.c.b16 %v1811, %v1811
        %v1853 = vpack.c.b16 %v1813, %v1812
        %v1854 = vpack.c.b16 %v1814, %v1814
        %v1855 = vpack.c.b16 %v1816, %v1815
        %v1856 = vpack.c.b16 %v1817, %v1817
        %v1857 = vpack.c.b16 %v1819, %v1818
        %v1858 = vpack.c.b16 %v1820, %v1820
        %v1859 = vpack.c.b16 %v1822, %v1821
        %v1860 = vpack.c.b16 %v1823, %v1823
        %v1861 = vpack.c.b16 %v1825, %v1824
        %v1862 = vpack.c.b16 %v1826, %v1826
        %v1863 = vpack.c.b16 %v1828, %v1827
        %v1864 = vpack.c.b16 %v1829, %v1829
        %v1865 = vpack.c.b16 %v1831, %v1830
        %v1866 = vpack.c.b16 %v1832, %v1832
        %v1867 = vpack.c.b16 %v1834, %v1833
        %v1868 = vpack.c.b16 %v1835, %v1835
        %v1869 = vpack.c.b16 %v1837, %v1836
        %v1870 = vpack.c.b16 %v1838, %v1838
        %v1871 = vrot.slane %v1839, 1
        %v1872 = vrot.slane %v1840, 1
        %v1873 = vsel %vm970, %v1871, %v1872
        %v1874 = vrot.slane %v1841, 1
        %v1875 = vrot.slane %v1842, 1
        %v1876 = vsel %vm970, %v1874, %v1875
        %v1877 = vrot.slane %v1843, 1
        %v1878 = vrot.slane %v1844, 1
        %v1879 = vsel %vm970, %v1877, %v1878
        %v1880 = vrot.slane %v1845, 1
        %v1881 = vrot.slane %v1846, 1
        %v1882 = vsel %vm970, %v1880, %v1881
        %v1883 = vrot.slane %v1847, 1
        %v1884 = vrot.slane %v1848, 1
        %v1885 = vsel %vm970, %v1883, %v1884
        %v1886 = vrot.slane %v1849, 1
        %v1887 = vrot.slane %v1850, 1
        %v1888 = vsel %vm970, %v1886, %v1887
        %v1889 = vrot.slane %v1851, 1
        %v1890 = vrot.slane %v1852, 1
        %v1891 = vsel %vm970, %v1889, %v1890
        %v1892 = vrot.slane %v1853, 1
        %v1893 = vrot.slane %v1854, 1
        %v1894 = vsel %vm970, %v1892, %v1893
        %v1895 = vrot.slane %v1855, 1
        %v1896 = vrot.slane %v1856, 1
        %v1897 = vsel %vm970, %v1895, %v1896
        %v1898 = vrot.slane %v1857, 1
        %v1899 = vrot.slane %v1858, 1
        %v1900 = vsel %vm970, %v1898, %v1899
        %v1901 = vrot.slane %v1859, 1
        %v1902 = vrot.slane %v1860, 1
        %v1903 = vsel %vm970, %v1901, %v1902
        %v1904 = vrot.slane %v1861, 1
        %v1905 = vrot.slane %v1862, 1
        %v1906 = vsel %vm970, %v1904, %v1905
        %v1907 = vrot.slane %v1863, 1
        %v1908 = vrot.slane %v1864, 1
        %v1909 = vsel %vm970, %v1907, %v1908
        %v1910 = vrot.slane %v1865, 1
        %v1911 = vrot.slane %v1866, 1
        %v1912 = vsel %vm970, %v1910, %v1911
        %v1913 = vrot.slane %v1867, 1
        %v1914 = vrot.slane %v1868, 1
        %v1915 = vsel %vm970, %v1913, %v1914
        %v1916 = vrot.slane %v1869, 1
        %v1917 = vrot.slane %v1870, 1
        %v1918 = vsel %vm970, %v1916, %v1917
        %1919 = vrot.lane.b32.xlu0 %v1873, 20
        %v1920 = vpop.permute.xlu0 %1919
        %1921 = vrot.lane.b32.xlu0 %v1876, 20
        %v1922 = vpop.permute.xlu0 %1921
        %1923 = vrot.lane.b32.xlu0 %v1879, 20
        %v1924 = vpop.permute.xlu0 %1923
        %1925 = vrot.lane.b32.xlu0 %v1882, 20
        %v1926 = vpop.permute.xlu0 %1925
        %1927 = vrot.lane.b32.xlu0 %v1885, 20
        %v1928 = vpop.permute.xlu0 %1927
        %1929 = vrot.lane.b32.xlu0 %v1888, 20
        %v1930 = vpop.permute.xlu0 %1929
        %1931 = vrot.lane.b32.xlu0 %v1891, 20
        %v1932 = vpop.permute.xlu0 %1931
        %1933 = vrot.lane.b32.xlu0 %v1894, 20
        %v1934 = vpop.permute.xlu0 %1933
        %1935 = vrot.lane.b32.xlu0 %v1897, 20
        %v1936 = vpop.permute.xlu0 %1935
        %1937 = vrot.lane.b32.xlu0 %v1900, 20
        %v1938 = vpop.permute.xlu0 %1937
        %1939 = vrot.lane.b32.xlu0 %v1903, 20
        %v1940 = vpop.permute.xlu0 %1939
        %1941 = vrot.lane.b32.xlu0 %v1906, 20
        %v1942 = vpop.permute.xlu0 %1941
        %1943 = vrot.lane.b32.xlu0 %v1909, 20
        %v1944 = vpop.permute.xlu0 %1943
        %1945 = vrot.lane.b32.xlu0 %v1912, 20
        %v1946 = vpop.permute.xlu0 %1945
        %1947 = vrot.lane.b32.xlu0 %v1915, 20
        %v1948 = vpop.permute.xlu0 %1947
        %1949 = vrot.lane.b32.xlu0 %v1918, 20
        %v1950 = vpop.permute.xlu0 %1949
        %vm1967 = vcmask 195744
        %1968 = vst.msk [vmem:[#allocation2] sm:$0xff] %vm1967, %v1920
        %1969 = vst.msk [vmem:[#allocation2 + $0x8] sm:$0xff] %vm1967, %v1922
        %1970 = vst.msk [vmem:[#allocation2 + $0x10] sm:$0xff] %vm1967, %v1924
        %1971 = vst.msk [vmem:[#allocation2 + $0x18] sm:$0xff] %vm1967, %v1926
        %1972 = vst.msk [vmem:[#allocation2 + $0x20] sm:$0xff] %vm1967, %v1928
        %1973 = vst.msk [vmem:[#allocation2 + $0x28] sm:$0xff] %vm1967, %v1930
        %1974 = vst.msk [vmem:[#allocation2 + $0x30] sm:$0xff] %vm1967, %v1932
        %1975 = vst.msk [vmem:[#allocation2 + $0x38] sm:$0xff] %vm1967, %v1934
        %1976 = vst.msk [vmem:[#allocation2 + $0x40] sm:$0xff] %vm1967, %v1936
        %1977 = vst.msk [vmem:[#allocation2 + $0x48] sm:$0xff] %vm1967, %v1938
        %1978 = vst.msk [vmem:[#allocation2 + $0x50] sm:$0xff] %vm1967, %v1940
        %1979 = vst.msk [vmem:[#allocation2 + $0x58] sm:$0xff] %vm1967, %v1942
        %1980 = vst.msk [vmem:[#allocation2 + $0x60] sm:$0xff] %vm1967, %v1944
        %1981 = vst.msk [vmem:[#allocation2 + $0x68] sm:$0xff] %vm1967, %v1946
        %1982 = vst.msk [vmem:[#allocation2 + $0x70] sm:$0xff] %vm1967, %v1948
        %1983 = vst.msk [vmem:[#allocation2 + $0x78] sm:$0xff] %vm1967, %v1950
        %s1984 = scalar_lea.vmem %s206, 24
        %v1985 = vld [vmem:[%s1984] sm:$0xf]
        %v1986 = vld [vmem:[%s1984 + $0x4] sm:$0xf]
        %v1987 = vld [vmem:[%s1984 + $0xc] sm:$0xf]
        %v1988 = vld [vmem:[%s1984 + $0x10] sm:$0xf]
        %v1989 = vld [vmem:[%s1984 + $0x18] sm:$0xf]
        %v1990 = vld [vmem:[%s1984 + $0x1c] sm:$0xf]
        %v1991 = vld [vmem:[%s1984 + $0x24] sm:$0xf]
        %v1992 = vld [vmem:[%s1984 + $0x28] sm:$0xf]
        %v1993 = vld [vmem:[%s1984 + $0x30] sm:$0xf]
        %v1994 = vld [vmem:[%s1984 + $0x34] sm:$0xf]
        %v1995 = vld [vmem:[%s1984 + $0x3c] sm:$0xf]
        %v1996 = vld [vmem:[%s1984 + $0x40] sm:$0xf]
        %v1997 = vld [vmem:[%s1984 + $0x48] sm:$0xf]
        %v1998 = vld [vmem:[%s1984 + $0x4c] sm:$0xf]
        %v1999 = vld [vmem:[%s1984 + $0x54] sm:$0xf]
        %v2000 = vld [vmem:[%s1984 + $0x58] sm:$0xf]
        %v2001 = vld [vmem:[%s1984 + $0x60] sm:$0xf]
        %v2002 = vld [vmem:[%s1984 + $0x64] sm:$0xf]
        %v2003 = vld [vmem:[%s1984 + $0x6c] sm:$0xf]
        %v2004 = vld [vmem:[%s1984 + $0x70] sm:$0xf]
        %v2005 = vld [vmem:[%s1984 + $0x78] sm:$0xf]
        %v2006 = vld [vmem:[%s1984 + $0x7c] sm:$0xf]
        %v2007 = vld [vmem:[%s1984 + $0x84] sm:$0xf]
        %v2008 = vld [vmem:[%s1984 + $0x88] sm:$0xf]
        %v2009 = vld [vmem:[%s1984 + $0x90] sm:$0xf]
        %v2010 = vld [vmem:[%s1984 + $0x94] sm:$0xf]
        %v2011 = vld [vmem:[%s1984 + $0x9c] sm:$0xf]
        %v2012 = vld [vmem:[%s1984 + $0xa0] sm:$0xf]
        %v2013 = vld [vmem:[%s1984 + $0xa8] sm:$0xf]
        %v2014 = vld [vmem:[%s1984 + $0xac] sm:$0xf]
        %v2015 = vld [vmem:[%s1984 + $0xb4] sm:$0xf]
        %v2016 = vld [vmem:[%s1984 + $0xb8] sm:$0xf]
        %v2049 = vunpack.c.l.b16 %v1985
        %v2050 = vunpack.c.l.b16 %v1986
        %v2051 = vunpack.c.l.b16 %v1987
        %v2052 = vunpack.c.l.b16 %v1988
        %v2053 = vunpack.c.l.b16 %v1989
        %v2054 = vunpack.c.l.b16 %v1990
        %v2055 = vunpack.c.l.b16 %v1991
        %v2056 = vunpack.c.l.b16 %v1992
        %v2057 = vunpack.c.l.b16 %v1993
        %v2058 = vunpack.c.l.b16 %v1994
        %v2059 = vunpack.c.l.b16 %v1995
        %v2060 = vunpack.c.l.b16 %v1996
        %v2061 = vunpack.c.l.b16 %v1997
        %v2062 = vunpack.c.l.b16 %v1998
        %v2063 = vunpack.c.l.b16 %v1999
        %v2064 = vunpack.c.l.b16 %v2000
        %v2065 = vunpack.c.l.b16 %v2001
        %v2066 = vunpack.c.l.b16 %v2002
        %v2067 = vunpack.c.l.b16 %v2003
        %v2068 = vunpack.c.l.b16 %v2004
        %v2069 = vunpack.c.l.b16 %v2005
        %v2070 = vunpack.c.l.b16 %v2006
        %v2071 = vunpack.c.l.b16 %v2007
        %v2072 = vunpack.c.l.b16 %v2008
        %v2073 = vunpack.c.l.b16 %v2009
        %v2074 = vunpack.c.l.b16 %v2010
        %v2075 = vunpack.c.l.b16 %v2011
        %v2076 = vunpack.c.l.b16 %v2012
        %v2077 = vunpack.c.l.b16 %v2013
        %v2078 = vunpack.c.l.b16 %v2014
        %v2079 = vunpack.c.l.b16 %v2015
        %v2080 = vunpack.c.l.b16 %v2016
        %v2081 = vpack.c.b16 %v2050, %v2049
        %v2082 = vpack.c.b16 %v2052, %v2051
        %v2083 = vpack.c.b16 %v2054, %v2053
        %v2084 = vpack.c.b16 %v2056, %v2055
        %v2085 = vpack.c.b16 %v2058, %v2057
        %v2086 = vpack.c.b16 %v2060, %v2059
        %v2087 = vpack.c.b16 %v2062, %v2061
        %v2088 = vpack.c.b16 %v2064, %v2063
        %v2089 = vpack.c.b16 %v2066, %v2065
        %v2090 = vpack.c.b16 %v2068, %v2067
        %v2091 = vpack.c.b16 %v2070, %v2069
        %v2092 = vpack.c.b16 %v2072, %v2071
        %v2093 = vpack.c.b16 %v2074, %v2073
        %v2094 = vpack.c.b16 %v2076, %v2075
        %v2095 = vpack.c.b16 %v2078, %v2077
        %v2096 = vpack.c.b16 %v2080, %v2079
        %2097 = vrot.lane.b32.xlu0 %v2081, 24
        %v2098 = vpop.permute.xlu0 %2097
        %2099 = vrot.lane.b32.xlu0 %v2082, 24
        %v2100 = vpop.permute.xlu0 %2099
        %2101 = vrot.lane.b32.xlu0 %v2083, 24
        %v2102 = vpop.permute.xlu0 %2101
        %2103 = vrot.lane.b32.xlu0 %v2084, 24
        %v2104 = vpop.permute.xlu0 %2103
        %2105 = vrot.lane.b32.xlu0 %v2085, 24
        %v2106 = vpop.permute.xlu0 %2105
        %2107 = vrot.lane.b32.xlu0 %v2086, 24
        %v2108 = vpop.permute.xlu0 %2107
        %2109 = vrot.lane.b32.xlu0 %v2087, 24
        %v2110 = vpop.permute.xlu0 %2109
        %2111 = vrot.lane.b32.xlu0 %v2088, 24
        %v2112 = vpop.permute.xlu0 %2111
        %2113 = vrot.lane.b32.xlu0 %v2089, 24
        %v2114 = vpop.permute.xlu0 %2113
        %2115 = vrot.lane.b32.xlu0 %v2090, 24
        %v2116 = vpop.permute.xlu0 %2115
        %2117 = vrot.lane.b32.xlu0 %v2091, 24
        %v2118 = vpop.permute.xlu0 %2117
        %2119 = vrot.lane.b32.xlu0 %v2092, 24
        %v2120 = vpop.permute.xlu0 %2119
        %2121 = vrot.lane.b32.xlu0 %v2093, 24
        %v2122 = vpop.permute.xlu0 %2121
        %2123 = vrot.lane.b32.xlu0 %v2094, 24
        %v2124 = vpop.permute.xlu0 %2123
        %2125 = vrot.lane.b32.xlu0 %v2095, 24
        %v2126 = vpop.permute.xlu0 %2125
        %2127 = vrot.lane.b32.xlu0 %v2096, 24
        %v2128 = vpop.permute.xlu0 %2127
        %vm2145 = vcmask 228544
        %2146 = vst.msk [vmem:[#allocation2] sm:$0xff] %vm2145, %v2098
        %2147 = vst.msk [vmem:[#allocation2 + $0x8] sm:$0xff] %vm2145, %v2100
        %2148 = vst.msk [vmem:[#allocation2 + $0x10] sm:$0xff] %vm2145, %v2102
        %2149 = vst.msk [vmem:[#allocation2 + $0x18] sm:$0xff] %vm2145, %v2104
        %2150 = vst.msk [vmem:[#allocation2 + $0x20] sm:$0xff] %vm2145, %v2106
        %2151 = vst.msk [vmem:[#allocation2 + $0x28] sm:$0xff] %vm2145, %v2108
        %2152 = vst.msk [vmem:[#allocation2 + $0x30] sm:$0xff] %vm2145, %v2110
        %2153 = vst.msk [vmem:[#allocation2 + $0x38] sm:$0xff] %vm2145, %v2112
        %2154 = vst.msk [vmem:[#allocation2 + $0x40] sm:$0xff] %vm2145, %v2114
        %2155 = vst.msk [vmem:[#allocation2 + $0x48] sm:$0xff] %vm2145, %v2116
        %2156 = vst.msk [vmem:[#allocation2 + $0x50] sm:$0xff] %vm2145, %v2118
        %2157 = vst.msk [vmem:[#allocation2 + $0x58] sm:$0xff] %vm2145, %v2120
        %2158 = vst.msk [vmem:[#allocation2 + $0x60] sm:$0xff] %vm2145, %v2122
        %2159 = vst.msk [vmem:[#allocation2 + $0x68] sm:$0xff] %vm2145, %v2124
        %2160 = vst.msk [vmem:[#allocation2 + $0x70] sm:$0xff] %vm2145, %v2126
        %2161 = vst.msk [vmem:[#allocation2 + $0x78] sm:$0xff] %vm2145, %v2128
        %v2162 = vld [vmem:[%s1984] sm:$0xf]
        %v2163 = vld [vmem:[%s1984 + $0x4] sm:$0xf]
        %v2164 = vld [vmem:[%s1984 + $0x8] sm:$0x1]
        %v2165 = vld [vmem:[%s1984 + $0xc] sm:$0xf]
        %v2166 = vld [vmem:[%s1984 + $0x10] sm:$0xf]
        %v2167 = vld [vmem:[%s1984 + $0x14] sm:$0x1]
        %v2168 = vld [vmem:[%s1984 + $0x18] sm:$0xf]
        %v2169 = vld [vmem:[%s1984 + $0x1c] sm:$0xf]
        %v2170 = vld [vmem:[%s1984 + $0x20] sm:$0x1]
        %v2171 = vld [vmem:[%s1984 + $0x24] sm:$0xf]
        %v2172 = vld [vmem:[%s1984 + $0x28] sm:$0xf]
        %v2173 = vld [vmem:[%s1984 + $0x2c] sm:$0x1]
        %v2174 = vld [vmem:[%s1984 + $0x30] sm:$0xf]
        %v2175 = vld [vmem:[%s1984 + $0x34] sm:$0xf]
        %v2176 = vld [vmem:[%s1984 + $0x38] sm:$0x1]
        %v2177 = vld [vmem:[%s1984 + $0x3c] sm:$0xf]
        %v2178 = vld [vmem:[%s1984 + $0x40] sm:$0xf]
        %v2179 = vld [vmem:[%s1984 + $0x44] sm:$0x1]
        %v2180 = vld [vmem:[%s1984 + $0x48] sm:$0xf]
        %v2181 = vld [vmem:[%s1984 + $0x4c] sm:$0xf]
        %v2182 = vld [vmem:[%s1984 + $0x50] sm:$0x1]
        %v2183 = vld [vmem:[%s1984 + $0x54] sm:$0xf]
        %v2184 = vld [vmem:[%s1984 + $0x58] sm:$0xf]
        %v2185 = vld [vmem:[%s1984 + $0x5c] sm:$0x1]
        %v2186 = vld [vmem:[%s1984 + $0x60] sm:$0xf]
        %v2187 = vld [vmem:[%s1984 + $0x64] sm:$0xf]
        %v2188 = vld [vmem:[%s1984 + $0x68] sm:$0x1]
        %v2189 = vld [vmem:[%s1984 + $0x6c] sm:$0xf]
        %v2190 = vld [vmem:[%s1984 + $0x70] sm:$0xf]
        %v2191 = vld [vmem:[%s1984 + $0x74] sm:$0x1]
        %v2192 = vld [vmem:[%s1984 + $0x78] sm:$0xf]
        %v2193 = vld [vmem:[%s1984 + $0x7c] sm:$0xf]
        %v2194 = vld [vmem:[%s1984 + $0x80] sm:$0x1]
        %v2195 = vld [vmem:[%s1984 + $0x84] sm:$0xf]
        %v2196 = vld [vmem:[%s1984 + $0x88] sm:$0xf]
        %v2197 = vld [vmem:[%s1984 + $0x8c] sm:$0x1]
        %v2198 = vld [vmem:[%s1984 + $0x90] sm:$0xf]
        %v2199 = vld [vmem:[%s1984 + $0x94] sm:$0xf]
        %v2200 = vld [vmem:[%s1984 + $0x98] sm:$0x1]
        %v2201 = vld [vmem:[%s1984 + $0x9c] sm:$0xf]
        %v2202 = vld [vmem:[%s1984 + $0xa0] sm:$0xf]
        %v2203 = vld [vmem:[%s1984 + $0xa4] sm:$0x1]
        %v2204 = vld [vmem:[%s1984 + $0xa8] sm:$0xf]
        %v2205 = vld [vmem:[%s1984 + $0xac] sm:$0xf]
        %v2206 = vld [vmem:[%s1984 + $0xb0] sm:$0x1]
        %v2207 = vld [vmem:[%s1984 + $0xb4] sm:$0xf]
        %v2208 = vld [vmem:[%s1984 + $0xb8] sm:$0xf]
        %v2209 = vld [vmem:[%s1984 + $0xbc] sm:$0x1]
        %v2258 = vunpack.c.l.b16 %v2162
        %v2259 = vunpack.c.l.b16 %v2163
        %v2260 = vunpack.c.l.b16 %v2164
        %v2261 = vunpack.c.l.b16 %v2165
        %v2262 = vunpack.c.l.b16 %v2166
        %v2263 = vunpack.c.l.b16 %v2167
        %v2264 = vunpack.c.l.b16 %v2168
        %v2265 = vunpack.c.l.b16 %v2169
        %v2266 = vunpack.c.l.b16 %v2170
        %v2267 = vunpack.c.l.b16 %v2171
        %v2268 = vunpack.c.l.b16 %v2172
        %v2269 = vunpack.c.l.b16 %v2173
        %v2270 = vunpack.c.l.b16 %v2174
        %v2271 = vunpack.c.l.b16 %v2175
        %v2272 = vunpack.c.l.b16 %v2176
        %v2273 = vunpack.c.l.b16 %v2177
        %v2274 = vunpack.c.l.b16 %v2178
        %v2275 = vunpack.c.l.b16 %v2179
        %v2276 = vunpack.c.l.b16 %v2180
        %v2277 = vunpack.c.l.b16 %v2181
        %v2278 = vunpack.c.l.b16 %v2182
        %v2279 = vunpack.c.l.b16 %v2183
        %v2280 = vunpack.c.l.b16 %v2184
        %v2281 = vunpack.c.l.b16 %v2185
        %v2282 = vunpack.c.l.b16 %v2186
        %v2283 = vunpack.c.l.b16 %v2187
        %v2284 = vunpack.c.l.b16 %v2188
        %v2285 = vunpack.c.l.b16 %v2189
        %v2286 = vunpack.c.l.b16 %v2190
        %v2287 = vunpack.c.l.b16 %v2191
        %v2288 = vunpack.c.l.b16 %v2192
        %v2289 = vunpack.c.l.b16 %v2193
        %v2290 = vunpack.c.l.b16 %v2194
        %v2291 = vunpack.c.l.b16 %v2195
        %v2292 = vunpack.c.l.b16 %v2196
        %v2293 = vunpack.c.l.b16 %v2197
        %v2294 = vunpack.c.l.b16 %v2198
        %v2295 = vunpack.c.l.b16 %v2199
        %v2296 = vunpack.c.l.b16 %v2200
        %v2297 = vunpack.c.l.b16 %v2201
        %v2298 = vunpack.c.l.b16 %v2202
        %v2299 = vunpack.c.l.b16 %v2203
        %v2300 = vunpack.c.l.b16 %v2204
        %v2301 = vunpack.c.l.b16 %v2205
        %v2302 = vunpack.c.l.b16 %v2206
        %v2303 = vunpack.c.l.b16 %v2207
        %v2304 = vunpack.c.l.b16 %v2208
        %v2305 = vunpack.c.l.b16 %v2209
        %v2306 = vpack.c.b16 %v2259, %v2258
        %v2307 = vpack.c.b16 %v2260, %v2260
        %v2308 = vpack.c.b16 %v2262, %v2261
        %v2309 = vpack.c.b16 %v2263, %v2263
        %v2310 = vpack.c.b16 %v2265, %v2264
        %v2311 = vpack.c.b16 %v2266, %v2266
        %v2312 = vpack.c.b16 %v2268, %v2267
        %v2313 = vpack.c.b16 %v2269, %v2269
        %v2314 = vpack.c.b16 %v2271, %v2270
        %v2315 = vpack.c.b16 %v2272, %v2272
        %v2316 = vpack.c.b16 %v2274, %v2273
        %v2317 = vpack.c.b16 %v2275, %v2275
        %v2318 = vpack.c.b16 %v2277, %v2276
        %v2319 = vpack.c.b16 %v2278, %v2278
        %v2320 = vpack.c.b16 %v2280, %v2279
        %v2321 = vpack.c.b16 %v2281, %v2281
        %v2322 = vpack.c.b16 %v2283, %v2282
        %v2323 = vpack.c.b16 %v2284, %v2284
        %v2324 = vpack.c.b16 %v2286, %v2285
        %v2325 = vpack.c.b16 %v2287, %v2287
        %v2326 = vpack.c.b16 %v2289, %v2288
        %v2327 = vpack.c.b16 %v2290, %v2290
        %v2328 = vpack.c.b16 %v2292, %v2291
        %v2329 = vpack.c.b16 %v2293, %v2293
        %v2330 = vpack.c.b16 %v2295, %v2294
        %v2331 = vpack.c.b16 %v2296, %v2296
        %v2332 = vpack.c.b16 %v2298, %v2297
        %v2333 = vpack.c.b16 %v2299, %v2299
        %v2334 = vpack.c.b16 %v2301, %v2300
        %v2335 = vpack.c.b16 %v2302, %v2302
        %v2336 = vpack.c.b16 %v2304, %v2303
        %v2337 = vpack.c.b16 %v2305, %v2305
        %v2339 = vshrl.u32 %v2306, 16
        %v2341 = vshll.u32 %v2306, 16
        %v2343 = vrot.slane %v2341, 1
        %v2344 = vor.u32 %v2339, %v2343
        %v2346 = vshll.u32 %v2307, 16
        %v2348 = vrot.slane %v2346, 1
        %v2349 = vsel %vm536, %v2344, %v2348
        %v2351 = vshrl.u32 %v2308, 16
        %v2353 = vshll.u32 %v2308, 16
        %v2355 = vrot.slane %v2353, 1
        %v2356 = vor.u32 %v2351, %v2355
        %v2358 = vshll.u32 %v2309, 16
        %v2360 = vrot.slane %v2358, 1
        %v2361 = vsel %vm536, %v2356, %v2360
        %v2363 = vshrl.u32 %v2310, 16
        %v2365 = vshll.u32 %v2310, 16
        %v2367 = vrot.slane %v2365, 1
        %v2368 = vor.u32 %v2363, %v2367
        %v2370 = vshll.u32 %v2311, 16
        %v2372 = vrot.slane %v2370, 1
        %v2373 = vsel %vm536, %v2368, %v2372
        %v2375 = vshrl.u32 %v2312, 16
        %v2377 = vshll.u32 %v2312, 16
        %v2379 = vrot.slane %v2377, 1
        %v2380 = vor.u32 %v2375, %v2379
        %v2382 = vshll.u32 %v2313, 16
        %v2384 = vrot.slane %v2382, 1
        %v2385 = vsel %vm536, %v2380, %v2384
        %v2387 = vshrl.u32 %v2314, 16
        %v2389 = vshll.u32 %v2314, 16
        %v2391 = vrot.slane %v2389, 1
        %v2392 = vor.u32 %v2387, %v2391
        %v2394 = vshll.u32 %v2315, 16
        %v2396 = vrot.slane %v2394, 1
        %v2397 = vsel %vm536, %v2392, %v2396
        %v2399 = vshrl.u32 %v2316, 16
        %v2401 = vshll.u32 %v2316, 16
        %v2403 = vrot.slane %v2401, 1
        %v2404 = vor.u32 %v2399, %v2403
        %v2406 = vshll.u32 %v2317, 16
        %v2408 = vrot.slane %v2406, 1
        %v2409 = vsel %vm536, %v2404, %v2408
        %v2411 = vshrl.u32 %v2318, 16
        %v2413 = vshll.u32 %v2318, 16
        %v2415 = vrot.slane %v2413, 1
        %v2416 = vor.u32 %v2411, %v2415
        %v2418 = vshll.u32 %v2319, 16
        %v2420 = vrot.slane %v2418, 1
        %v2421 = vsel %vm536, %v2416, %v2420
        %v2423 = vshrl.u32 %v2320, 16
        %v2425 = vshll.u32 %v2320, 16
        %v2427 = vrot.slane %v2425, 1
        %v2428 = vor.u32 %v2423, %v2427
        %v2430 = vshll.u32 %v2321, 16
        %v2432 = vrot.slane %v2430, 1
        %v2433 = vsel %vm536, %v2428, %v2432
        %v2435 = vshrl.u32 %v2322, 16
        %v2437 = vshll.u32 %v2322, 16
        %v2439 = vrot.slane %v2437, 1
        %v2440 = vor.u32 %v2435, %v2439
        %v2442 = vshll.u32 %v2323, 16
        %v2444 = vrot.slane %v2442, 1
        %v2445 = vsel %vm536, %v2440, %v2444
        %v2447 = vshrl.u32 %v2324, 16
        %v2449 = vshll.u32 %v2324, 16
        %v2451 = vrot.slane %v2449, 1
        %v2452 = vor.u32 %v2447, %v2451
        %v2454 = vshll.u32 %v2325, 16
        %v2456 = vrot.slane %v2454, 1
        %v2457 = vsel %vm536, %v2452, %v2456
        %v2459 = vshrl.u32 %v2326, 16
        %v2461 = vshll.u32 %v2326, 16
        %v2463 = vrot.slane %v2461, 1
        %v2464 = vor.u32 %v2459, %v2463
        %v2466 = vshll.u32 %v2327, 16
        %v2468 = vrot.slane %v2466, 1
        %v2469 = vsel %vm536, %v2464, %v2468
        %v2471 = vshrl.u32 %v2328, 16
        %v2473 = vshll.u32 %v2328, 16
        %v2475 = vrot.slane %v2473, 1
        %v2476 = vor.u32 %v2471, %v2475
        %v2478 = vshll.u32 %v2329, 16
        %v2480 = vrot.slane %v2478, 1
        %v2481 = vsel %vm536, %v2476, %v2480
        %v2483 = vshrl.u32 %v2330, 16
        %v2485 = vshll.u32 %v2330, 16
        %v2487 = vrot.slane %v2485, 1
        %v2488 = vor.u32 %v2483, %v2487
        %v2490 = vshll.u32 %v2331, 16
        %v2492 = vrot.slane %v2490, 1
        %v2493 = vsel %vm536, %v2488, %v2492
        %v2495 = vshrl.u32 %v2332, 16
        %v2497 = vshll.u32 %v2332, 16
        %v2499 = vrot.slane %v2497, 1
        %v2500 = vor.u32 %v2495, %v2499
        %v2502 = vshll.u32 %v2333, 16
        %v2504 = vrot.slane %v2502, 1
        %v2505 = vsel %vm536, %v2500, %v2504
        %v2507 = vshrl.u32 %v2334, 16
        %v2509 = vshll.u32 %v2334, 16
        %v2511 = vrot.slane %v2509, 1
        %v2512 = vor.u32 %v2507, %v2511
        %v2514 = vshll.u32 %v2335, 16
        %v2516 = vrot.slane %v2514, 1
        %v2517 = vsel %vm536, %v2512, %v2516
        %v2519 = vshrl.u32 %v2336, 16
        %v2521 = vshll.u32 %v2336, 16
        %v2523 = vrot.slane %v2521, 1
        %v2524 = vor.u32 %v2519, %v2523
        %v2526 = vshll.u32 %v2337, 16
        %v2528 = vrot.slane %v2526, 1
        %v2529 = vsel %vm536, %v2524, %v2528
        %2530 = vrot.lane.b32.xlu0 %v2349, 28
        %v2531 = vpop.permute.xlu0 %2530
        %2532 = vrot.lane.b32.xlu0 %v2361, 28
        %v2533 = vpop.permute.xlu0 %2532
        %2534 = vrot.lane.b32.xlu0 %v2373, 28
        %v2535 = vpop.permute.xlu0 %2534
        %2536 = vrot.lane.b32.xlu0 %v2385, 28
        %v2537 = vpop.permute.xlu0 %2536
        %2538 = vrot.lane.b32.xlu0 %v2397, 28
        %v2539 = vpop.permute.xlu0 %2538
        %2540 = vrot.lane.b32.xlu0 %v2409, 28
        %v2541 = vpop.permute.xlu0 %2540
        %2542 = vrot.lane.b32.xlu0 %v2421, 28
        %v2543 = vpop.permute.xlu0 %2542
        %2544 = vrot.lane.b32.xlu0 %v2433, 28
        %v2545 = vpop.permute.xlu0 %2544
        %2546 = vrot.lane.b32.xlu0 %v2445, 28
        %v2547 = vpop.permute.xlu0 %2546
        %2548 = vrot.lane.b32.xlu0 %v2457, 28
        %v2549 = vpop.permute.xlu0 %2548
        %2550 = vrot.lane.b32.xlu0 %v2469, 28
        %v2551 = vpop.permute.xlu0 %2550
        %2552 = vrot.lane.b32.xlu0 %v2481, 28
        %v2553 = vpop.permute.xlu0 %2552
        %2554 = vrot.lane.b32.xlu0 %v2493, 28
        %v2555 = vpop.permute.xlu0 %2554
        %2556 = vrot.lane.b32.xlu0 %v2505, 28
        %v2557 = vpop.permute.xlu0 %2556
        %2558 = vrot.lane.b32.xlu0 %v2517, 28
        %v2559 = vpop.permute.xlu0 %2558
        %2560 = vrot.lane.b32.xlu0 %v2529, 28
        %v2561 = vpop.permute.xlu0 %2560
        %vm2578 = vcmask 261344
        %2579 = vst.msk [vmem:[#allocation2] sm:$0xff] %vm2578, %v2531
        %2580 = vst.msk [vmem:[#allocation2 + $0x8] sm:$0xff] %vm2578, %v2533
        %2581 = vst.msk [vmem:[#allocation2 + $0x10] sm:$0xff] %vm2578, %v2535
        %2582 = vst.msk [vmem:[#allocation2 + $0x18] sm:$0xff] %vm2578, %v2537
        %2583 = vst.msk [vmem:[#allocation2 + $0x20] sm:$0xff] %vm2578, %v2539
        %2584 = vst.msk [vmem:[#allocation2 + $0x28] sm:$0xff] %vm2578, %v2541
        %2585 = vst.msk [vmem:[#allocation2 + $0x30] sm:$0xff] %vm2578, %v2543
        %2586 = vst.msk [vmem:[#allocation2 + $0x38] sm:$0xff] %vm2578, %v2545
        %2587 = vst.msk [vmem:[#allocation2 + $0x40] sm:$0xff] %vm2578, %v2547
        %2588 = vst.msk [vmem:[#allocation2 + $0x48] sm:$0xff] %vm2578, %v2549
        %2589 = vst.msk [vmem:[#allocation2 + $0x50] sm:$0xff] %vm2578, %v2551
        %2590 = vst.msk [vmem:[#allocation2 + $0x58] sm:$0xff] %vm2578, %v2553
        %2591 = vst.msk [vmem:[#allocation2 + $0x60] sm:$0xff] %vm2578, %v2555
        %2592 = vst.msk [vmem:[#allocation2 + $0x68] sm:$0xff] %vm2578, %v2557
        %2593 = vst.msk [vmem:[#allocation2 + $0x70] sm:$0xff] %vm2578, %v2559
        %2594 = vst.msk [vmem:[#allocation2 + $0x78] sm:$0xff] %vm2578, %v2561
        %v2595 = vld [vmem:[%s1984] sm:$0xe]
        %v2596 = vld [vmem:[%s1984 + $0x4] sm:$0xf]
        %v2597 = vld [vmem:[%s1984 + $0x8] sm:$0x1]
        %v2598 = vld [vmem:[%s1984 + $0xc] sm:$0xe]
        %v2599 = vld [vmem:[%s1984 + $0x10] sm:$0xf]
        %v2600 = vld [vmem:[%s1984 + $0x14] sm:$0x1]
        %v2601 = vld [vmem:[%s1984 + $0x18] sm:$0xe]
        %v2602 = vld [vmem:[%s1984 + $0x1c] sm:$0xf]
        %v2603 = vld [vmem:[%s1984 + $0x20] sm:$0x1]
        %v2604 = vld [vmem:[%s1984 + $0x24] sm:$0xe]
        %v2605 = vld [vmem:[%s1984 + $0x28] sm:$0xf]
        %v2606 = vld [vmem:[%s1984 + $0x2c] sm:$0x1]
        %v2607 = vld [vmem:[%s1984 + $0x30] sm:$0xe]
        %v2608 = vld [vmem:[%s1984 + $0x34] sm:$0xf]
        %v2609 = vld [vmem:[%s1984 + $0x38] sm:$0x1]
        %v2610 = vld [vmem:[%s1984 + $0x3c] sm:$0xe]
        %v2611 = vld [vmem:[%s1984 + $0x40] sm:$0xf]
        %v2612 = vld [vmem:[%s1984 + $0x44] sm:$0x1]
        %v2613 = vld [vmem:[%s1984 + $0x48] sm:$0xe]
        %v2614 = vld [vmem:[%s1984 + $0x4c] sm:$0xf]
        %v2615 = vld [vmem:[%s1984 + $0x50] sm:$0x1]
        %v2616 = vld [vmem:[%s1984 + $0x54] sm:$0xe]
        %v2617 = vld [vmem:[%s1984 + $0x58] sm:$0xf]
        %v2618 = vld [vmem:[%s1984 + $0x5c] sm:$0x1]
        %v2619 = vld [vmem:[%s1984 + $0x60] sm:$0xe]
        %v2620 = vld [vmem:[%s1984 + $0x64] sm:$0xf]
        %v2621 = vld [vmem:[%s1984 + $0x68] sm:$0x1]
        %v2622 = vld [vmem:[%s1984 + $0x6c] sm:$0xe]
        %v2623 = vld [vmem:[%s1984 + $0x70] sm:$0xf]
        %v2624 = vld [vmem:[%s1984 + $0x74] sm:$0x1]
        %v2625 = vld [vmem:[%s1984 + $0x78] sm:$0xe]
        %v2626 = vld [vmem:[%s1984 + $0x7c] sm:$0xf]
        %v2627 = vld [vmem:[%s1984 + $0x80] sm:$0x1]
        %v2628 = vld [vmem:[%s1984 + $0x84] sm:$0xe]
        %v2629 = vld [vmem:[%s1984 + $0x88] sm:$0xf]
        %v2630 = vld [vmem:[%s1984 + $0x8c] sm:$0x1]
        %v2631 = vld [vmem:[%s1984 + $0x90] sm:$0xe]
        %v2632 = vld [vmem:[%s1984 + $0x94] sm:$0xf]
        %v2633 = vld [vmem:[%s1984 + $0x98] sm:$0x1]
        %v2634 = vld [vmem:[%s1984 + $0x9c] sm:$0xe]
        %v2635 = vld [vmem:[%s1984 + $0xa0] sm:$0xf]
        %v2636 = vld [vmem:[%s1984 + $0xa4] sm:$0x1]
        %v2637 = vld [vmem:[%s1984 + $0xa8] sm:$0xe]
        %v2638 = vld [vmem:[%s1984 + $0xac] sm:$0xf]
        %v2639 = vld [vmem:[%s1984 + $0xb0] sm:$0x1]
        %v2640 = vld [vmem:[%s1984 + $0xb4] sm:$0xe]
        %v2641 = vld [vmem:[%s1984 + $0xb8] sm:$0xf]
        %v2642 = vld [vmem:[%s1984 + $0xbc] sm:$0x1]
        %v2691 = vunpack.c.l.b16 %v2595
        %v2692 = vunpack.c.l.b16 %v2596
        %v2693 = vunpack.c.l.b16 %v2597
        %v2694 = vunpack.c.l.b16 %v2598
        %v2695 = vunpack.c.l.b16 %v2599
        %v2696 = vunpack.c.l.b16 %v2600
        %v2697 = vunpack.c.l.b16 %v2601
        %v2698 = vunpack.c.l.b16 %v2602
        %v2699 = vunpack.c.l.b16 %v2603
        %v2700 = vunpack.c.l.b16 %v2604
        %v2701 = vunpack.c.l.b16 %v2605
        %v2702 = vunpack.c.l.b16 %v2606
        %v2703 = vunpack.c.l.b16 %v2607
        %v2704 = vunpack.c.l.b16 %v2608
        %v2705 = vunpack.c.l.b16 %v2609
        %v2706 = vunpack.c.l.b16 %v2610
        %v2707 = vunpack.c.l.b16 %v2611
        %v2708 = vunpack.c.l.b16 %v2612
        %v2709 = vunpack.c.l.b16 %v2613
        %v2710 = vunpack.c.l.b16 %v2614
        %v2711 = vunpack.c.l.b16 %v2615
        %v2712 = vunpack.c.l.b16 %v2616
        %v2713 = vunpack.c.l.b16 %v2617
        %v2714 = vunpack.c.l.b16 %v2618
        %v2715 = vunpack.c.l.b16 %v2619
        %v2716 = vunpack.c.l.b16 %v2620
        %v2717 = vunpack.c.l.b16 %v2621
        %v2718 = vunpack.c.l.b16 %v2622
        %v2719 = vunpack.c.l.b16 %v2623
        %v2720 = vunpack.c.l.b16 %v2624
        %v2721 = vunpack.c.l.b16 %v2625
        %v2722 = vunpack.c.l.b16 %v2626
        %v2723 = vunpack.c.l.b16 %v2627
        %v2724 = vunpack.c.l.b16 %v2628
        %v2725 = vunpack.c.l.b16 %v2629
        %v2726 = vunpack.c.l.b16 %v2630
        %v2727 = vunpack.c.l.b16 %v2631
        %v2728 = vunpack.c.l.b16 %v2632
        %v2729 = vunpack.c.l.b16 %v2633
        %v2730 = vunpack.c.l.b16 %v2634
        %v2731 = vunpack.c.l.b16 %v2635
        %v2732 = vunpack.c.l.b16 %v2636
        %v2733 = vunpack.c.l.b16 %v2637
        %v2734 = vunpack.c.l.b16 %v2638
        %v2735 = vunpack.c.l.b16 %v2639
        %v2736 = vunpack.c.l.b16 %v2640
        %v2737 = vunpack.c.l.b16 %v2641
        %v2738 = vunpack.c.l.b16 %v2642
        %v2739 = vpack.c.b16 %v2692, %v2691
        %v2740 = vpack.c.b16 %v2693, %v2693
        %v2741 = vpack.c.b16 %v2695, %v2694
        %v2742 = vpack.c.b16 %v2696, %v2696
        %v2743 = vpack.c.b16 %v2698, %v2697
        %v2744 = vpack.c.b16 %v2699, %v2699
        %v2745 = vpack.c.b16 %v2701, %v2700
        %v2746 = vpack.c.b16 %v2702, %v2702
        %v2747 = vpack.c.b16 %v2704, %v2703
        %v2748 = vpack.c.b16 %v2705, %v2705
        %v2749 = vpack.c.b16 %v2707, %v2706
        %v2750 = vpack.c.b16 %v2708, %v2708
        %v2751 = vpack.c.b16 %v2710, %v2709
        %v2752 = vpack.c.b16 %v2711, %v2711
        %v2753 = vpack.c.b16 %v2713, %v2712
        %v2754 = vpack.c.b16 %v2714, %v2714
        %v2755 = vpack.c.b16 %v2716, %v2715
        %v2756 = vpack.c.b16 %v2717, %v2717
        %v2757 = vpack.c.b16 %v2719, %v2718
        %v2758 = vpack.c.b16 %v2720, %v2720
        %v2759 = vpack.c.b16 %v2722, %v2721
        %v2760 = vpack.c.b16 %v2723, %v2723
        %v2761 = vpack.c.b16 %v2725, %v2724
        %v2762 = vpack.c.b16 %v2726, %v2726
        %v2763 = vpack.c.b16 %v2728, %v2727
        %v2764 = vpack.c.b16 %v2729, %v2729
        %v2765 = vpack.c.b16 %v2731, %v2730
        %v2766 = vpack.c.b16 %v2732, %v2732
        %v2767 = vpack.c.b16 %v2734, %v2733
        %v2768 = vpack.c.b16 %v2735, %v2735
        %v2769 = vpack.c.b16 %v2737, %v2736
        %v2770 = vpack.c.b16 %v2738, %v2738
        %v2771 = vrot.slane %v2739, 1
        %v2772 = vrot.slane %v2740, 1
        %v2773 = vsel %vm970, %v2771, %v2772
        %v2774 = vrot.slane %v2741, 1
        %v2775 = vrot.slane %v2742, 1
        %v2776 = vsel %vm970, %v2774, %v2775
        %v2777 = vrot.slane %v2743, 1
        %v2778 = vrot.slane %v2744, 1
        %v2779 = vsel %vm970, %v2777, %v2778
        %v2780 = vrot.slane %v2745, 1
        %v2781 = vrot.slane %v2746, 1
        %v2782 = vsel %vm970, %v2780, %v2781
        %v2783 = vrot.slane %v2747, 1
        %v2784 = vrot.slane %v2748, 1
        %v2785 = vsel %vm970, %v2783, %v2784
        %v2786 = vrot.slane %v2749, 1
        %v2787 = vrot.slane %v2750, 1
        %v2788 = vsel %vm970, %v2786, %v2787
        %v2789 = vrot.slane %v2751, 1
        %v2790 = vrot.slane %v2752, 1
        %v2791 = vsel %vm970, %v2789, %v2790
        %v2792 = vrot.slane %v2753, 1
        %v2793 = vrot.slane %v2754, 1
        %v2794 = vsel %vm970, %v2792, %v2793
        %v2795 = vrot.slane %v2755, 1
        %v2796 = vrot.slane %v2756, 1
        %v2797 = vsel %vm970, %v2795, %v2796
        %v2798 = vrot.slane %v2757, 1
        %v2799 = vrot.slane %v2758, 1
        %v2800 = vsel %vm970, %v2798, %v2799
        %v2801 = vrot.slane %v2759, 1
        %v2802 = vrot.slane %v2760, 1
        %v2803 = vsel %vm970, %v2801, %v2802
        %v2804 = vrot.slane %v2761, 1
        %v2805 = vrot.slane %v2762, 1
        %v2806 = vsel %vm970, %v2804, %v2805
        %v2807 = vrot.slane %v2763, 1
        %v2808 = vrot.slane %v2764, 1
        %v2809 = vsel %vm970, %v2807, %v2808
        %v2810 = vrot.slane %v2765, 1
        %v2811 = vrot.slane %v2766, 1
        %v2812 = vsel %vm970, %v2810, %v2811
        %v2813 = vrot.slane %v2767, 1
        %v2814 = vrot.slane %v2768, 1
        %v2815 = vsel %vm970, %v2813, %v2814
        %v2816 = vrot.slane %v2769, 1
        %v2817 = vrot.slane %v2770, 1
        %v2818 = vsel %vm970, %v2816, %v2817
        %2819 = vrot.lane.b32.xlu0 %v2773, 32
        %v2820 = vpop.permute.xlu0 %2819
        %2821 = vrot.lane.b32.xlu0 %v2776, 32
        %v2822 = vpop.permute.xlu0 %2821
        %2823 = vrot.lane.b32.xlu0 %v2779, 32
        %v2824 = vpop.permute.xlu0 %2823
        %2825 = vrot.lane.b32.xlu0 %v2782, 32
        %v2826 = vpop.permute.xlu0 %2825
        %2827 = vrot.lane.b32.xlu0 %v2785, 32
        %v2828 = vpop.permute.xlu0 %2827
        %2829 = vrot.lane.b32.xlu0 %v2788, 32
        %v2830 = vpop.permute.xlu0 %2829
        %2831 = vrot.lane.b32.xlu0 %v2791, 32
        %v2832 = vpop.permute.xlu0 %2831
        %2833 = vrot.lane.b32.xlu0 %v2794, 32
        %v2834 = vpop.permute.xlu0 %2833
        %2835 = vrot.lane.b32.xlu0 %v2797, 32
        %v2836 = vpop.permute.xlu0 %2835
        %2837 = vrot.lane.b32.xlu0 %v2800, 32
        %v2838 = vpop.permute.xlu0 %2837
        %2839 = vrot.lane.b32.xlu0 %v2803, 32
        %v2840 = vpop.permute.xlu0 %2839
        %2841 = vrot.lane.b32.xlu0 %v2806, 32
        %v2842 = vpop.permute.xlu0 %2841
        %2843 = vrot.lane.b32.xlu0 %v2809, 32
        %v2844 = vpop.permute.xlu0 %2843
        %2845 = vrot.lane.b32.xlu0 %v2812, 32
        %v2846 = vpop.permute.xlu0 %2845
        %2847 = vrot.lane.b32.xlu0 %v2815, 32
        %v2848 = vpop.permute.xlu0 %2847
        %2849 = vrot.lane.b32.xlu0 %v2818, 32
        %v2850 = vpop.permute.xlu0 %2849
        %vm2867 = vcmask 294144
        %2868 = vst.msk [vmem:[#allocation2] sm:$0xff] %vm2867, %v2820
        %2869 = vst.msk [vmem:[#allocation2 + $0x8] sm:$0xff] %vm2867, %v2822
        %2870 = vst.msk [vmem:[#allocation2 + $0x10] sm:$0xff] %vm2867, %v2824
        %2871 = vst.msk [vmem:[#allocation2 + $0x18] sm:$0xff] %vm2867, %v2826
        %2872 = vst.msk [vmem:[#allocation2 + $0x20] sm:$0xff] %vm2867, %v2828
        %2873 = vst.msk [vmem:[#allocation2 + $0x28] sm:$0xff] %vm2867, %v2830
        %2874 = vst.msk [vmem:[#allocation2 + $0x30] sm:$0xff] %vm2867, %v2832
        %2875 = vst.msk [vmem:[#allocation2 + $0x38] sm:$0xff] %vm2867, %v2834
        %2876 = vst.msk [vmem:[#allocation2 + $0x40] sm:$0xff] %vm2867, %v2836
        %2877 = vst.msk [vmem:[#allocation2 + $0x48] sm:$0xff] %vm2867, %v2838
        %2878 = vst.msk [vmem:[#allocation2 + $0x50] sm:$0xff] %vm2867, %v2840
        %2879 = vst.msk [vmem:[#allocation2 + $0x58] sm:$0xff] %vm2867, %v2842
        %2880 = vst.msk [vmem:[#allocation2 + $0x60] sm:$0xff] %vm2867, %v2844
        %2881 = vst.msk [vmem:[#allocation2 + $0x68] sm:$0xff] %vm2867, %v2846
        %2882 = vst.msk [vmem:[#allocation2 + $0x70] sm:$0xff] %vm2867, %v2848
        %2883 = vst.msk [vmem:[#allocation2 + $0x78] sm:$0xff] %vm2867, %v2850
        %vm2884 = vcmask 1047840
        %2885 = vst.msk [vmem:[#allocation2] sm:$0xff] %vm2884, 0
        %2886 = vst.msk [vmem:[#allocation2 + $0x8] sm:$0xff] %vm2884, 0
        %2887 = vst.msk [vmem:[#allocation2 + $0x10] sm:$0xff] %vm2884, 0
        %2888 = vst.msk [vmem:[#allocation2 + $0x18] sm:$0xff] %vm2884, 0
        %2889 = vst.msk [vmem:[#allocation2 + $0x20] sm:$0xff] %vm2884, 0
        %2890 = vst.msk [vmem:[#allocation2 + $0x28] sm:$0xff] %vm2884, 0
        %2891 = vst.msk [vmem:[#allocation2 + $0x30] sm:$0xff] %vm2884, 0
        %2892 = vst.msk [vmem:[#allocation2 + $0x38] sm:$0xff] %vm2884, 0
        %2893 = vst.msk [vmem:[#allocation2 + $0x40] sm:$0xff] %vm2884, 0
        %2894 = vst.msk [vmem:[#allocation2 + $0x48] sm:$0xff] %vm2884, 0
        %2895 = vst.msk [vmem:[#allocation2 + $0x50] sm:$0xff] %vm2884, 0
        %2896 = vst.msk [vmem:[#allocation2 + $0x58] sm:$0xff] %vm2884, 0
        %2897 = vst.msk [vmem:[#allocation2 + $0x60] sm:$0xff] %vm2884, 0
        %2898 = vst.msk [vmem:[#allocation2 + $0x68] sm:$0xff] %vm2884, 0
        %2899 = vst.msk [vmem:[#allocation2 + $0x70] sm:$0xff] %vm2884, 0
        %2900 = vst.msk [vmem:[#allocation2 + $0x78] sm:$0xff] %vm2884, 0
        %v2901 = vld [vmem:[#allocation2] sm:$0xff]
        %v2902 = vld [vmem:[#allocation2 + $0x8] sm:$0xff]
        %v2903 = vld [vmem:[#allocation2 + $0x10] sm:$0xff]
        %v2904 = vld [vmem:[#allocation2 + $0x18] sm:$0xff]
        %v2905 = vld [vmem:[#allocation2 + $0x20] sm:$0xff]
        %v2906 = vld [vmem:[#allocation2 + $0x28] sm:$0xff]
        %v2907 = vld [vmem:[#allocation2 + $0x30] sm:$0xff]
        %v2908 = vld [vmem:[#allocation2 + $0x38] sm:$0xff]
        %v2909 = vld [vmem:[#allocation2 + $0x40] sm:$0xff]
        %v2910 = vld [vmem:[#allocation2 + $0x48] sm:$0xff]
        %v2911 = vld [vmem:[#allocation2 + $0x50] sm:$0xff]
        %v2912 = vld [vmem:[#allocation2 + $0x58] sm:$0xff]
        %v2913 = vld [vmem:[#allocation2 + $0x60] sm:$0xff]
        %v2914 = vld [vmem:[#allocation2 + $0x68] sm:$0xff]
        %v2915 = vld [vmem:[#allocation2 + $0x70] sm:$0xff]
        %v2916 = vld [vmem:[#allocation2 + $0x78] sm:$0xff]
        %v2917 = vld [vmem:[%s210] sm:$0xf]
        %v2918 = vld [vmem:[%s210 + $0x4] sm:$0xf]
        %v2919 = vld [vmem:[%s210 + $0x8] sm:$0xf]
        %v2920 = vld [vmem:[%s210 + $0xc] sm:$0xf]
        %v2921 = vld [vmem:[%s210 + $0x10] sm:$0xf]
        %v2922 = vld [vmem:[%s210 + $0x14] sm:$0xf]
        %v2923 = vld [vmem:[%s210 + $0x18] sm:$0xf]
        %v2924 = vld [vmem:[%s210 + $0x1c] sm:$0xf]
        %v2925 = vld [vmem:[%s210 + $0x20] sm:$0xf]
        %v2926 = vld [vmem:[%s210 + $0x24] sm:$0xf]
        %v2927 = vld [vmem:[%s210 + $0x28] sm:$0xf]
        %v2928 = vld [vmem:[%s210 + $0x2c] sm:$0xf]
        %v2929 = vld [vmem:[%s210 + $0x30] sm:$0xf]
        %v2930 = vld [vmem:[%s210 + $0x34] sm:$0xf]
        %v2931 = vld [vmem:[%s210 + $0x38] sm:$0xf]
        %v2932 = vld [vmem:[%s210 + $0x3c] sm:$0xf]
        %v2933 = vld [vmem:[%s213] sm:$0x1]
        %v2935 = vlaneseq
        %v2936 = vshrl.u32 %v2935, 7
        %v2937 = vsub.s32 0, %v2936
        %v2938 = vrot.slane %v2933, %v2937
        %v2956 = vunpack.c.l.b16 %v2917
        %v2957 = vunpack.c.l.b16 %v2918
        %v2958 = vunpack.c.l.b16 %v2919
        %v2959 = vunpack.c.l.b16 %v2920
        %v2960 = vunpack.c.l.b16 %v2921
        %v2961 = vunpack.c.l.b16 %v2922
        %v2962 = vunpack.c.l.b16 %v2923
        %v2963 = vunpack.c.l.b16 %v2924
        %v2964 = vunpack.c.l.b16 %v2925
        %v2965 = vunpack.c.l.b16 %v2926
        %v2966 = vunpack.c.l.b16 %v2927
        %v2967 = vunpack.c.l.b16 %v2928
        %v2968 = vunpack.c.l.b16 %v2929
        %v2969 = vunpack.c.l.b16 %v2930
        %v2970 = vunpack.c.l.b16 %v2931
        %v2971 = vunpack.c.l.b16 %v2932
        %v2972 = vpack.c.b16 %v2957, %v2956
        %v2973 = vpack.c.b16 %v2959, %v2958
        %v2974 = vpack.c.b16 %v2961, %v2960
        %v2975 = vpack.c.b16 %v2963, %v2962
        %v2976 = vpack.c.b16 %v2965, %v2964
        %v2977 = vpack.c.b16 %v2967, %v2966
        %v2978 = vpack.c.b16 %v2969, %v2968
        %v2979 = vpack.c.b16 %v2971, %v2970
        %2988 = vmatprep.subr.bf16.mxu0 0
        %2989 = vmatpush1.bf16.msra.mxu0 %v2972
        %2990 = vmatprep.subr.bf16.mxu0 0
        %2991 = vmatpush1.bf16.msra.mxu0 %v2973
        %2992 = vmatprep.subr.bf16.mxu0 0
        %2993 = vmatpush1.bf16.msra.mxu0 %v2974
        %2994 = vmatprep.subr.bf16.mxu0 0
        %2995 = vmatpush1.bf16.msra.mxu0 %v2975
        %2996 = vmatprep.subr.bf16.mxu0 0
        %2997 = vmatpush1.bf16.msra.mxu0 %v2976
        %2998 = vmatprep.subr.bf16.mxu0 0
        %2999 = vmatpush1.bf16.msra.mxu0 %v2977
        %3000 = vmatprep.subr.bf16.mxu0 0
        %3001 = vmatpush1.bf16.msra.mxu0 %v2978
        %3002 = vmatprep.subr.bf16.mxu0 0
        %3003 = vmatpush1.bf16.msra.mxu0 %v2979
        %3004 = vmatprep.subr.bf16.mxu0 0
        %3005 = vmatpush1.bf16.msra.mxu0 0
        %3006 = vmatprep.subr.bf16.mxu0 0
        %3007 = vmatpush1.bf16.msra.mxu0 0
        %3008 = vmatprep.subr.bf16.mxu0 0
        %3009 = vmatpush1.bf16.msra.mxu0 0
        %3010 = vmatprep.subr.bf16.mxu0 0
        %3011 = vmatpush1.bf16.msra.mxu0 0
        %3012 = vmatprep.subr.bf16.mxu0 0
        %3013 = vmatpush1.bf16.msra.mxu0 0
        %3014 = vmatprep.subr.bf16.mxu0 0
        %3015 = vmatpush1.bf16.msra.mxu0 0
        %3016 = vmatprep.subr.bf16.mxu0 0
        %3017 = vmatpush1.bf16.msra.mxu0 0
        %3018 = vmatprep.subr.bf16.mxu0 0
        %3019 = vmatpush1.bf16.msra.mxu0 0
        %3020 = vmatprep.mubr.bf16.mxu0 0
        %3021 = vmatmul.mubr.bf16.gmra.mrb[0].mxu0 %v2901
        %v3022 = vpop.f32.mrb[0].mxu0
        %v3023 = vadd.f32 %v2938, %v3022
        %v3024 = vpop.f32.mrb[0].mxu0
        %v3025 = vpop.f32.mrb[0].mxu0
        %v3026 = vadd.f32 %v2938, %v3025
        %v3027 = vpop.f32.mrb[0].mxu0
        %3028 = vmatprep.mubr.bf16.mxu0 0
        %3029 = vmatmul.mubr.bf16.gmra.mrb[0].mxu0 %v2902
        %v3030 = vpop.f32.mrb[0].mxu0
        %v3031 = vadd.f32 %v2938, %v3030
        %v3032 = vpop.f32.mrb[0].mxu0
        %v3033 = vpop.f32.mrb[0].mxu0
        %v3034 = vadd.f32 %v2938, %v3033
        %v3035 = vpop.f32.mrb[0].mxu0
        %3036 = vmatprep.mubr.bf16.mxu0 0
        %3037 = vmatmul.mubr.bf16.gmra.mrb[0].mxu0 %v2903
        %v3038 = vpop.f32.mrb[0].mxu0
        %v3039 = vadd.f32 %v2938, %v3038
        %v3040 = vpop.f32.mrb[0].mxu0
        %v3041 = vpop.f32.mrb[0].mxu0
        %v3042 = vadd.f32 %v2938, %v3041
        %v3043 = vpop.f32.mrb[0].mxu0
        %3044 = vmatprep.mubr.bf16.mxu0 0
        %3045 = vmatmul.mubr.bf16.gmra.mrb[0].mxu0 %v2904
        %v3046 = vpop.f32.mrb[0].mxu0
        %v3047 = vadd.f32 %v2938, %v3046
        %v3048 = vpop.f32.mrb[0].mxu0
        %v3049 = vpop.f32.mrb[0].mxu0
        %v3050 = vadd.f32 %v2938, %v3049
        %v3051 = vpop.f32.mrb[0].mxu0
        %3052 = vmatprep.mubr.bf16.mxu0 0
        %3053 = vmatmul.mubr.bf16.gmra.mrb[0].mxu0 %v2905
        %v3054 = vpop.f32.mrb[0].mxu0
        %v3055 = vadd.f32 %v2938, %v3054
        %v3056 = vpop.f32.mrb[0].mxu0
        %v3057 = vpop.f32.mrb[0].mxu0
        %v3058 = vadd.f32 %v2938, %v3057
        %v3059 = vpop.f32.mrb[0].mxu0
        %3060 = vmatprep.mubr.bf16.mxu0 0
        %3061 = vmatmul.mubr.bf16.gmra.mrb[0].mxu0 %v2906
        %v3062 = vpop.f32.mrb[0].mxu0
        %v3063 = vadd.f32 %v2938, %v3062
        %v3064 = vpop.f32.mrb[0].mxu0
        %v3065 = vpop.f32.mrb[0].mxu0
        %v3066 = vadd.f32 %v2938, %v3065
        %v3067 = vpop.f32.mrb[0].mxu0
        %3068 = vmatprep.mubr.bf16.mxu0 0
        %3069 = vmatmul.mubr.bf16.gmra.mrb[0].mxu0 %v2907
        %v3070 = vpop.f32.mrb[0].mxu0
        %v3071 = vadd.f32 %v2938, %v3070
        %v3072 = vpop.f32.mrb[0].mxu0
        %v3073 = vpop.f32.mrb[0].mxu0
        %v3074 = vadd.f32 %v2938, %v3073
        %v3075 = vpop.f32.mrb[0].mxu0
        %3076 = vmatprep.mubr.bf16.mxu0 0
        %3077 = vmatmul.mubr.bf16.gmra.mrb[0].mxu0 %v2908
        %v3078 = vpop.f32.mrb[0].mxu0
        %v3079 = vadd.f32 %v2938, %v3078
        %v3080 = vpop.f32.mrb[0].mxu0
        %v3081 = vpop.f32.mrb[0].mxu0
        %v3082 = vadd.f32 %v2938, %v3081
        %v3083 = vpop.f32.mrb[0].mxu0
        %3084 = vmatprep.mubr.bf16.mxu0 0
        %3085 = vmatmul.mubr.bf16.gmra.mrb[0].mxu0 %v2909
        %v3086 = vpop.f32.mrb[0].mxu0
        %v3087 = vadd.f32 %v2938, %v3086
        %v3088 = vpop.f32.mrb[0].mxu0
        %v3089 = vpop.f32.mrb[0].mxu0
        %v3090 = vadd.f32 %v2938, %v3089
        %v3091 = vpop.f32.mrb[0].mxu0
        %3092 = vmatprep.mubr.bf16.mxu0 0
        %3093 = vmatmul.mubr.bf16.gmra.mrb[0].mxu0 %v2910
        %v3094 = vpop.f32.mrb[0].mxu0
        %v3095 = vadd.f32 %v2938, %v3094
        %v3096 = vpop.f32.mrb[0].mxu0
        %v3097 = vpop.f32.mrb[0].mxu0
        %v3098 = vadd.f32 %v2938, %v3097
        %v3099 = vpop.f32.mrb[0].mxu0
        %3100 = vmatprep.mubr.bf16.mxu0 0
        %3101 = vmatmul.mubr.bf16.gmra.mrb[0].mxu0 %v2911
        %v3102 = vpop.f32.mrb[0].mxu0
        %v3103 = vadd.f32 %v2938, %v3102
        %v3104 = vpop.f32.mrb[0].mxu0
        %v3105 = vpop.f32.mrb[0].mxu0
        %v3106 = vadd.f32 %v2938, %v3105
        %v3107 = vpop.f32.mrb[0].mxu0
        %3108 = vmatprep.mubr.bf16.mxu0 0
        %3109 = vmatmul.mubr.bf16.gmra.mrb[0].mxu0 %v2912
        %v3110 = vpop.f32.mrb[0].mxu0
        %v3111 = vadd.f32 %v2938, %v3110
        %v3112 = vpop.f32.mrb[0].mxu0
        %v3113 = vpop.f32.mrb[0].mxu0
        %v3114 = vadd.f32 %v2938, %v3113
        %v3115 = vpop.f32.mrb[0].mxu0
        %3116 = vmatprep.mubr.bf16.mxu0 0
        %3117 = vmatmul.mubr.bf16.gmra.mrb[0].mxu0 %v2913
        %v3118 = vpop.f32.mrb[0].mxu0
        %v3119 = vadd.f32 %v2938, %v3118
        %v3120 = vpop.f32.mrb[0].mxu0
        %v3121 = vpop.f32.mrb[0].mxu0
        %v3122 = vadd.f32 %v2938, %v3121
        %v3123 = vpop.f32.mrb[0].mxu0
        %3124 = vmatprep.mubr.bf16.mxu0 0
        %3125 = vmatmul.mubr.bf16.gmra.mrb[0].mxu0 %v2914
        %v3126 = vpop.f32.mrb[0].mxu0
        %v3127 = vadd.f32 %v2938, %v3126
        %v3128 = vpop.f32.mrb[0].mxu0
        %v3129 = vpop.f32.mrb[0].mxu0
        %v3130 = vadd.f32 %v2938, %v3129
        %v3131 = vpop.f32.mrb[0].mxu0
        %3132 = vmatprep.mubr.bf16.mxu0 0
        %3133 = vmatmul.mubr.bf16.gmra.mrb[0].mxu0 %v2915
        %v3134 = vpop.f32.mrb[0].mxu0
        %v3135 = vadd.f32 %v2938, %v3134
        %v3136 = vpop.f32.mrb[0].mxu0
        %v3137 = vpop.f32.mrb[0].mxu0
        %v3138 = vadd.f32 %v2938, %v3137
        %v3139 = vpop.f32.mrb[0].mxu0
        %3140 = vmatprep.mubr.bf16.mxu0 0
        %3141 = vmatmul.mubr.bf16.gmra.mrb[0].mxu0 %v2916
        %v3142 = vpop.f32.mrb[0].mxu0
        %v3143 = vadd.f32 %v2938, %v3142
        %v3144 = vpop.f32.mrb[0].mxu0
        %v3145 = vpop.f32.mrb[0].mxu0
        %v3146 = vadd.f32 %v2938, %v3145
        %v3147 = vpop.f32.mrb[0].mxu0
        %3148 = vdwg.mxu0
        %v3149 = vmax.f32 %v3023, 0.0
        %v3150 = vmax.f32 %v3026, 0.0
        %v3151 = vmax.f32 %v3031, 0.0
        %v3152 = vmax.f32 %v3034, 0.0
        %v3153 = vmax.f32 %v3039, 0.0
        %v3154 = vmax.f32 %v3042, 0.0
        %v3155 = vmax.f32 %v3047, 0.0
        %v3156 = vmax.f32 %v3050, 0.0
        %v3157 = vmax.f32 %v3055, 0.0
        %v3158 = vmax.f32 %v3058, 0.0
        %v3159 = vmax.f32 %v3063, 0.0
        %v3160 = vmax.f32 %v3066, 0.0
        %v3161 = vmax.f32 %v3071, 0.0
        %v3162 = vmax.f32 %v3074, 0.0
        %v3163 = vmax.f32 %v3079, 0.0
        %v3164 = vmax.f32 %v3082, 0.0
        %v3165 = vmax.f32 %v3087, 0.0
        %v3166 = vmax.f32 %v3090, 0.0
        %v3167 = vmax.f32 %v3095, 0.0
        %v3168 = vmax.f32 %v3098, 0.0
        %v3169 = vmax.f32 %v3103, 0.0
        %v3170 = vmax.f32 %v3106, 0.0
        %v3171 = vmax.f32 %v3111, 0.0
        %v3172 = vmax.f32 %v3114, 0.0
        %v3173 = vmax.f32 %v3119, 0.0
        %v3174 = vmax.f32 %v3122, 0.0
        %v3175 = vmax.f32 %v3127, 0.0
        %v3176 = vmax.f32 %v3130, 0.0
        %v3177 = vmax.f32 %v3135, 0.0
        %v3178 = vmax.f32 %v3138, 0.0
        %v3179 = vmax.f32 %v3143, 0.0
        %v3180 = vmax.f32 %v3146, 0.0
        %v3181 = vpack.c.bf16 %v3150, %v3149
        %v3182 = vpack.c.bf16 %v3152, %v3151
        %v3183 = vpack.c.bf16 %v3154, %v3153
        %v3184 = vpack.c.bf16 %v3156, %v3155
        %v3185 = vpack.c.bf16 %v3158, %v3157
        %v3186 = vpack.c.bf16 %v3160, %v3159
        %v3187 = vpack.c.bf16 %v3162, %v3161
        %v3188 = vpack.c.bf16 %v3164, %v3163
        %v3189 = vpack.c.bf16 %v3166, %v3165
        %v3190 = vpack.c.bf16 %v3168, %v3167
        %v3191 = vpack.c.bf16 %v3170, %v3169
        %v3192 = vpack.c.bf16 %v3172, %v3171
        %v3193 = vpack.c.bf16 %v3174, %v3173
        %v3194 = vpack.c.bf16 %v3176, %v3175
        %v3195 = vpack.c.bf16 %v3178, %v3177
        %v3196 = vpack.c.bf16 %v3180, %v3179
        %v3213 = vunpack.c.l.b16 %v3181
        %v3214 = vunpack.c.h.b16 %v3181
        %v3215 = vunpack.c.l.b16 %v3182
        %v3216 = vunpack.c.h.b16 %v3182
        %v3217 = vunpack.c.l.b16 %v3183
        %v3218 = vunpack.c.h.b16 %v3183
        %v3219 = vunpack.c.l.b16 %v3184
        %v3220 = vunpack.c.h.b16 %v3184
        %v3221 = vunpack.c.l.b16 %v3185
        %v3222 = vunpack.c.h.b16 %v3185
        %v3223 = vunpack.c.l.b16 %v3186
        %v3224 = vunpack.c.h.b16 %v3186
        %v3225 = vunpack.c.l.b16 %v3187
        %v3226 = vunpack.c.h.b16 %v3187
        %v3227 = vunpack.c.l.b16 %v3188
        %v3228 = vunpack.c.h.b16 %v3188
        %v3229 = vunpack.c.l.b16 %v3189
        %v3230 = vunpack.c.h.b16 %v3189
        %v3231 = vunpack.c.l.b16 %v3190
        %v3232 = vunpack.c.h.b16 %v3190
        %v3233 = vunpack.c.l.b16 %v3191
        %v3234 = vunpack.c.h.b16 %v3191
        %v3235 = vunpack.c.l.b16 %v3192
        %v3236 = vunpack.c.h.b16 %v3192
        %v3237 = vunpack.c.l.b16 %v3193
        %v3238 = vunpack.c.h.b16 %v3193
        %v3239 = vunpack.c.l.b16 %v3194
        %v3240 = vunpack.c.h.b16 %v3194
        %v3241 = vunpack.c.l.b16 %v3195
        %v3242 = vunpack.c.h.b16 %v3195
        %v3243 = vunpack.c.l.b16 %v3196
        %v3244 = vunpack.c.h.b16 %v3196
        %v3245 = vpack.c.b16 %v3213, %v3213
        %v3246 = vpack.c.b16 %v3214, %v3214
        %v3247 = vpack.c.b16 %v3215, %v3215
        %v3248 = vpack.c.b16 %v3216, %v3216
        %v3249 = vpack.c.b16 %v3217, %v3217
        %v3250 = vpack.c.b16 %v3218, %v3218
        %v3251 = vpack.c.b16 %v3219, %v3219
        %v3252 = vpack.c.b16 %v3220, %v3220
        %v3253 = vpack.c.b16 %v3221, %v3221
        %v3254 = vpack.c.b16 %v3222, %v3222
        %v3255 = vpack.c.b16 %v3223, %v3223
        %v3256 = vpack.c.b16 %v3224, %v3224
        %v3257 = vpack.c.b16 %v3225, %v3225
        %v3258 = vpack.c.b16 %v3226, %v3226
        %v3259 = vpack.c.b16 %v3227, %v3227
        %v3260 = vpack.c.b16 %v3228, %v3228
        %v3261 = vpack.c.b16 %v3229, %v3229
        %v3262 = vpack.c.b16 %v3230, %v3230
        %v3263 = vpack.c.b16 %v3231, %v3231
        %v3264 = vpack.c.b16 %v3232, %v3232
        %v3265 = vpack.c.b16 %v3233, %v3233
        %v3266 = vpack.c.b16 %v3234, %v3234
        %v3267 = vpack.c.b16 %v3235, %v3235
        %v3268 = vpack.c.b16 %v3236, %v3236
        %v3269 = vpack.c.b16 %v3237, %v3237
        %v3270 = vpack.c.b16 %v3238, %v3238
        %v3271 = vpack.c.b16 %v3239, %v3239
        %v3272 = vpack.c.b16 %v3240, %v3240
        %v3273 = vpack.c.b16 %v3241, %v3241
        %v3274 = vpack.c.b16 %v3242, %v3242
        %v3275 = vpack.c.b16 %v3243, %v3243
        %v3276 = vpack.c.b16 %v3244, %v3244
        %3309 = vst [vmem:[%s201] sm:$0xf] %v3245
        %3310 = vst [vmem:[%s201 + $0x4] sm:$0xf] %v3246
        %3311 = vst [vmem:[%s201 + $0x8] sm:$0xf] %v3247
        %3312 = vst [vmem:[%s201 + $0xc] sm:$0xf] %v3248
        %3313 = vst [vmem:[%s201 + $0x10] sm:$0xf] %v3249
        %3314 = vst [vmem:[%s201 + $0x14] sm:$0xf] %v3250
        %3315 = vst [vmem:[%s201 + $0x18] sm:$0xf] %v3251
        %3316 = vst [vmem:[%s201 + $0x1c] sm:$0xf] %v3252
        %3317 = vst [vmem:[%s201 + $0x20] sm:$0xf] %v3253
        %3318 = vst [vmem:[%s201 + $0x24] sm:$0xf] %v3254
        %3319 = vst [vmem:[%s201 + $0x28] sm:$0xf] %v3255
        %3320 = vst [vmem:[%s201 + $0x2c] sm:$0xf] %v3256
        %3321 = vst [vmem:[%s201 + $0x30] sm:$0xf] %v3257
        %3322 = vst [vmem:[%s201 + $0x34] sm:$0xf] %v3258
        %3323 = vst [vmem:[%s201 + $0x38] sm:$0xf] %v3259
        %3324 = vst [vmem:[%s201 + $0x3c] sm:$0xf] %v3260
        %3325 = vst [vmem:[%s201 + $0x40] sm:$0xf] %v3261
        %3326 = vst [vmem:[%s201 + $0x44] sm:$0xf] %v3262
        %3327 = vst [vmem:[%s201 + $0x48] sm:$0xf] %v3263
        %3328 = vst [vmem:[%s201 + $0x4c] sm:$0xf] %v3264
        %3329 = vst [vmem:[%s201 + $0x50] sm:$0xf] %v3265
        %3330 = vst [vmem:[%s201 + $0x54] sm:$0xf] %v3266
        %3331 = vst [vmem:[%s201 + $0x58] sm:$0xf] %v3267
        %3332 = vst [vmem:[%s201 + $0x5c] sm:$0xf] %v3268
        %3333 = vst [vmem:[%s201 + $0x60] sm:$0xf] %v3269
        %3334 = vst [vmem:[%s201 + $0x64] sm:$0xf] %v3270
        %3335 = vst [vmem:[%s201 + $0x68] sm:$0xf] %v3271
        %3336 = vst [vmem:[%s201 + $0x6c] sm:$0xf] %v3272
        %3337 = vst [vmem:[%s201 + $0x70] sm:$0xf] %v3273
        %3338 = vst [vmem:[%s201 + $0x74] sm:$0xf] %v3274
        %3339 = vst [vmem:[%s201 + $0x78] sm:$0xf] %v3275
        %3340 = vst [vmem:[%s201 + $0x7c] sm:$0xf] %v3276
        %s3341 = sand.u32 %s117, 1
        %s3342 = scalar_lea.sflag [#allocation4], %s3341
        %s3343 = sand.u32 %s117, 1
        %s3344 = smul.addr %s3343, 128
        %s3345 = scalar_lea.vmem [#allocation3], %s3344
        // Predicated region
        $region33: #{tpu_custom_call.1} parent=31 // pred_check
          %p3346 = pneg %p127
        $region34: #{tpu_custom_call.1} parent=31 // pred_check_branch
          %3348 = sbr.rel (%p3346) target = $region36
        $region35: #{tpu_custom_call.1} parent=31 // pred_region
          %s3350 = ssub.s32 2048, 2048
          %3351 = vsyncadd %s3342, %s3350
          %s3352 = smul.addr %s21, 32
          %s3353 = sadd.s32 %s22, %s3352
          %s3354 = smul.addr %s3353, 64
          %s3355 = scalar_lea.hbm %s3, %s3354
          %s3356 = sshll.u32 %s3345, 4
          %s3357 = int_to_ptr.vmem [resolvable:$true] %s3356
          %3362 = dma.vmem_to_hbm [thread:$0]  %s3357, 2048, %s3355, %s3342, 64, 64, 4
        $region36: #{tpu_custom_call.1} parent=31 // pred_fallthru
          _
      $region32: #{tpu_custom_call.1} parent=5 // pred_fallthru
        _
      %p3363 = scmp.le.s32.totalorder 2, %s12
      // Predicated region
      $region37: #{tpu_custom_call.1} parent=5 // pred_check
        %p3364 = pneg %p3363
      $region38: #{tpu_custom_call.1} parent=5 // pred_check_branch
        %3366 = sbr.rel (%p3364) target = $region40
      $region39: #{tpu_custom_call.1} parent=5 // pred_region
        %s3367 = ssub.s32 %s12, 2
        // Predicated region
        $region41: #{tpu_custom_call.1} parent=39 // pred_check
          %p3368 = pneg %p133
        $region42: #{tpu_custom_call.1} parent=39 // pred_check_branch
          %3370 = sbr.rel (%p3368) target = $region44
        $region43: #{tpu_custom_call.1} parent=39 // pred_region
          %s3371 = sand.u32 %s118, 1
          %s3372 = scalar_lea.sflag [#allocation4], %s3371
          %s3373 = sand.u32 %s118, 1
          %s3374 = smul.addr %s3373, 128
          %s3375 = scalar_lea.vmem [#allocation3], %s3374
          %3376 = dma.done %s3372, 2048
        $region44: #{tpu_custom_call.1} parent=39 // pred_fallthru
          _
      $region40: #{tpu_custom_call.1} parent=5 // pred_fallthru
        _
    $region6: #{tpu_custom_call.1} parent=1 // loop_footer
      %s16 = sadd.s32 1, %s12
    $region7: #{tpu_custom_call.1} parent=1 // loop_footer_branch
      %11 = sbr.rel target = $region3
    $region8: #{tpu_custom_call.1} parent=1 // loop_exit
      _
    %3377 = vsyncpa [#allocation4], 1
    %s3378 = scalar_lea.sflag [#allocation4], 1
    %3379 = vsyncpa %s3378, 1

</llo_original>
